<compile_context>
chip_gen: v6e
topology: v6e:2x2x1
jax: 0.10.0
libtpu: 0.0.40
codegen_flags: <defaults>
</compile_context>

<pallas_src>
import functools

import jax
import jax.numpy as jnp
from jax import lax
from jax.experimental import pallas as pl
from jax.experimental.pallas import tpu as pltpu


def _basic_block3d_kernel(w_ref, b_ref, m_ref, x_ref, o_ref, *, C, D, H, W,
                          out_c, nb, neg_slope):
    # w_ref : VMEM (3, out_c, 9*C) bf16 -- BN-folded weights; leading axis = kd (depth tap),
    #          columns ordered (kh, kw, c) to match the tap-matrix rows.
    # b_ref : VMEM (out_c, 1) f32       -- BN-folded bias
    # m_ref : VMEM (6, S) f32           -- boundary masks [w>=1, w<=W-2, h>=1, h<=H-2, d>=1, d<=D-2]
    # x_ref : VMEM (nb, C, S)           -- batch block, lane-dense merged D*H*W axis
    # o_ref : VMEM (nb, out_c, S)
    S = D * H * W
    HW = H * W

    masks = m_ref[...]                                   # (6, S) f32
    m_wm, m_wp = masks[0:1], masks[1:2]                  # width  taps dw = -1 / +1
    m_hm, m_hp = masks[2:3], masks[3:4]                  # height taps dh = -1 / +1
    m_dm, m_dp = masks[4:5], masks[5:6]                  # depth  taps dd = -1 / +1
    bias = b_ref[...]                                    # (out_c, 1) f32
    w_m, w_0, w_p = w_ref[0], w_ref[1], w_ref[2]         # (out_c, 9*C) bf16, kd = 0/1/2

    for i in range(nb):                                  # static unroll over the batch block
        x = x_ref[i].astype(jnp.float32)                 # (C, S)

        # Pre-masked width variants (dw = -1, 0, +1).  All shifts are lane rolls on the
        # merged D*H*W axis; invalid (wrapped-in) source positions land exactly on the
        # masked lanes, so the mask zeroing makes the wraparound harmless.
        xw = (pltpu.roll(x, 1, axis=1) * m_wm,           # x[.., w-1]
              x,                                         # x[.., w  ]
              pltpu.roll(x, S - 1, axis=1) * m_wp)       # x[.., w+1]

        # 9 (dh, dw) taps of the per-depth-plane 2D conv; row order (kh, kw, c).
        taps = []
        for kh in range(3):
            dh = kh - 1
            for kw in range(3):
                t = xw[kw]
                if dh == -1:
                    t = pltpu.roll(t, W, axis=1) * m_hm       # x[.., h-1, .]
                elif dh == 1:
                    t = pltpu.roll(t, S - W, axis=1) * m_hp   # x[.., h+1, .]
                taps.append(t)                                # each (C, S)
        tap_mat = jnp.concatenate(taps, axis=0).astype(jnp.bfloat16)   # (9*C, S)

        # One MXU contraction per depth tap (shared RHS); f32 accumulation.
        q_m = jnp.dot(w_m, tap_mat, preferred_element_type=jnp.float32)  # kd=0 -> x[d-1]
        q_0 = jnp.dot(w_0, tap_mat, preferred_element_type=jnp.float32)  # kd=1 -> x[d]
        q_p = jnp.dot(w_p, tap_mat, preferred_element_type=jnp.float32)  # kd=2 -> x[d+1]

        # Combine depth taps: whole-lane-tile rolls (+/-HW) of the plane results,
        # masked at the d = 0 / d = D-1 boundaries.
        y = (q_0
             + m_dm * pltpu.roll(q_m, HW, axis=1)
             + m_dp * pltpu.roll(q_p, S - HW, axis=1))
        y = y + bias
        y = jnp.where(y > 0, y, neg_slope * y)           # LeakyReLU(0.01)
        y = y + x                                        # residual (out_c == C)
        o_ref[i] = y.astype(o_ref.dtype)                 # dense store, 8 full lane tiles


def basic_block3d(x, conv_w, conv_b, bn_gamma, bn_beta, bn_mean, bn_var,
                  *, eps=1e-5, neg_slope=0.01, batch_block=None):
    """x: (N, C, D, H, W); conv_w: (outC, C, 3, 3, 3).  Returns x + LeakyReLU(BN(Conv(x)))."""
    N, C, D, H, W = x.shape
    out_c = conv_w.shape[0]
    assert out_c == C, "residual add requires inC == outC"
    assert conv_w.shape == (out_c, C, 3, 3, 3)
    S = D * H * W
    # TODO(synk): training-mode BatchNorm (batch statistics + running-stat update) and the
    # 'gn'/'in' normalization variants are not fused; this is the eval-mode 'bn' forward.

    if batch_block is None:
        # Largest batch block that still leaves >= 2 grid steps (keeps both v7x TCs busy).
        batch_block = max((nb for nb in range(1, N + 1)
                           if N % nb == 0 and N // nb >= 2), default=N)
    assert N % batch_block == 0
    grid = (N // batch_block,)

    # Fold eval-mode BN into the conv.
    scale = bn_gamma / jnp.sqrt(bn_var + eps)                         # (outC,)
    w_fold = conv_w * scale[:, None, None, None, None]                # (outC, C, 3, 3, 3)
    b_fold = (conv_b - bn_mean) * scale + bn_beta                     # (outC,)

    # (kd, outC, kh, kw, c): leading depth-tap axis; columns ordered (kh, kw, c) to match
    # the kernel's tap-matrix rows.  bf16 feeds the MXU at native rate (f32 accumulate).
    w3 = jnp.transpose(w_fold, (2, 0, 3, 4, 1)).reshape(3, out_c, 9 * C)
    w3 = w3.astype(jnp.bfloat16)
    b2 = b_fold.reshape(out_c, 1).astype(jnp.float32)

    # Boundary masks over the merged D*H*W lane axis (computed once on the host).
    lane = jnp.arange(S, dtype=jnp.int32)
    w_c = lane % W
    h_c = (lane // W) % H
    d_c = lane // (H * W)
    masks = jnp.stack([w_c >= 1, w_c <= W - 2,
                       h_c >= 1, h_c <= H - 2,
                       d_c >= 1, d_c <= D - 2]).astype(jnp.float32)   # (6, S)

    x2 = x.reshape(N, C, S)                                           # free, lane-dense

    kernel = functools.partial(_basic_block3d_kernel, C=C, D=D, H=H, W=W,
                               out_c=out_c, nb=batch_block, neg_slope=neg_slope)
    out = pl.pallas_call(
        kernel,
        out_shape=jax.ShapeDtypeStruct((N, out_c, S), x.dtype),
        grid=grid,
        in_specs=[
            pl.BlockSpec((3, out_c, 9 * C), lambda n: (0, 0, 0)),     # folded weights
            pl.BlockSpec((out_c, 1), lambda n: (0, 0)),               # folded bias
            pl.BlockSpec((6, S), lambda n: (0, 0)),                   # boundary masks
            pl.BlockSpec((batch_block, C, S), lambda n: (n, 0, 0)),   # batch block
        ],
        out_specs=pl.BlockSpec((batch_block, out_c, S), lambda n: (n, 0, 0)),
        compiler_params=pltpu.CompilerParams(
            dimension_semantics=("parallel",),
            vmem_limit_bytes=32 * 1024 * 1024),
    )(w3, b2, masks, x2)
    return out.reshape(N, out_c, D, H, W)


def _reference(x, conv_w, conv_b, bn_gamma, bn_beta, bn_mean, bn_var,
               *, eps=1e-5, neg_slope=0.01):
    """Pure-JAX reference matching the PyTorch module (eval-mode BN)."""
    y = lax.conv_general_dilated(
        x, conv_w,
        window_strides=(1, 1, 1),
        padding=((1, 1), (1, 1), (1, 1)),
        dimension_numbers=("NCDHW", "OIDHW", "NCDHW"),
        precision=lax.Precision.HIGHEST)
    y = y + conv_b[None, :, None, None, None]
    inv = (1.0 / jnp.sqrt(bn_var + eps))[None, :, None, None, None]
    y = (y - bn_mean[None, :, None, None, None]) * inv
    y = bn_gamma[None, :, None, None, None] * y + bn_beta[None, :, None, None, None]
    y = jnp.where(y > 0, y, neg_slope * y)
    return x + y


if __name__ == "__main__":
    key = jax.random.PRNGKey(0)
    kx, kw, kb, kg, kbe, km, kv = jax.random.split(key, 7)

    # inC == outC == 4 (residual); D*H*W = 1024 -> 8 full lane tiles per channel.
    # N=4 with batch_block auto -> 2 grid steps x 2 batch elements per step.
    N, C, D, H, W = 4, 4, 8, 8, 16

    x = jax.random.normal(kx, (N, C, D, H, W), dtype=jnp.float32)
    conv_w = 0.1 * jax.random.normal(kw, (C, C, 3, 3, 3), dtype=jnp.float32)
    conv_b = 0.1 * jax.random.normal(kb, (C,), dtype=jnp.float32)
    bn_gamma = 1.0 + 0.1 * jax.random.normal(kg, (C,), dtype=jnp.float32)
    bn_beta = 0.1 * jax.random.normal(kbe, (C,), dtype=jnp.float32)
    bn_mean = 0.1 * jax.random.normal(km, (C,), dtype=jnp.float32)
    bn_var = jax.random.uniform(kv, (C,), dtype=jnp.float32, minval=0.5, maxval=1.5)

    out = basic_block3d(x, conv_w, conv_b, bn_gamma, bn_beta, bn_mean, bn_var)
    out = jax.block_until_ready(out)

    ref = jax.block_until_ready(
        _reference(x, conv_w, conv_b, bn_gamma, bn_beta, bn_mean, bn_var))

    assert out.shape == (N, C, D, H, W), out.shape
    # Tolerance covers bf16 MXU inputs (f32 accumulation over K=9*C) vs the
    # HIGHEST-precision f32 XLA reference conv; structural bugs would be O(0.1+).
    assert jnp.allclose(out, ref, atol=2e-2, rtol=2e-2), \
        float(jnp.max(jnp.abs(out - ref)))

    print("KERNEL_OK")
</pallas_src>

<mosaic_0001>
module attributes {stable_mosaic.version = 11 : i64} {
  func.func @_basic_block3d_kernel(%arg0: i32, %arg1: memref<3x4x36xbf16, #tpu.memory_space<vmem>>, %arg2: memref<4x1xf32, #tpu.memory_space<vmem>>, %arg3: memref<6x1024xf32, #tpu.memory_space<vmem>>, %arg4: memref<2x4x1024xf32, #tpu.memory_space<vmem>>, %arg5: memref<2x4x1024xf32, #tpu.memory_space<vmem>>) attributes {dimension_semantics = [#tpu.dimension_semantics<parallel>], iteration_bounds = array<i64: 2>, scalar_prefetch = 0 : i64, scratch_operands = 0 : i64, tpu.core_type = #tpu.core_type<tc>, window_params = [{pipeline_mode = #tpu.pipeline_mode<synchronous>, transform_indices = @transform_0, window_bounds = array<i64: 3, 4, 36>}, {pipeline_mode = #tpu.pipeline_mode<synchronous>, transform_indices = @transform_1, window_bounds = array<i64: 4, 1>}, {pipeline_mode = #tpu.pipeline_mode<synchronous>, transform_indices = @transform_2, window_bounds = array<i64: 6, 1024>}, {transform_indices = @transform_3, window_bounds = array<i64: 2, 4, 1024>}, {transform_indices = @transform_4, window_bounds = array<i64: 2, 4, 1024>}]} {
    %c0 = arith.constant 0 : index
    %c0_0 = arith.constant 0 : index
    %0 = vector.load %arg3[%c0, %c0_0] : memref<6x1024xf32, #tpu.memory_space<vmem>>, vector<6x1024xf32>
    %1 = vector.extract_strided_slice %0 {offsets = [0, 0], sizes = [1, 1024], strides = [1, 1]} : vector<6x1024xf32> to vector<1x1024xf32>
    %2 = vector.extract_strided_slice %0 {offsets = [1, 0], sizes = [1, 1024], strides = [1, 1]} : vector<6x1024xf32> to vector<1x1024xf32>
    %3 = vector.extract_strided_slice %0 {offsets = [2, 0], sizes = [1, 1024], strides = [1, 1]} : vector<6x1024xf32> to vector<1x1024xf32>
    %4 = vector.extract_strided_slice %0 {offsets = [3, 0], sizes = [1, 1024], strides = [1, 1]} : vector<6x1024xf32> to vector<1x1024xf32>
    %5 = vector.extract_strided_slice %0 {offsets = [4, 0], sizes = [1, 1024], strides = [1, 1]} : vector<6x1024xf32> to vector<1x1024xf32>
    %6 = vector.extract_strided_slice %0 {offsets = [5, 0], sizes = [1, 1024], strides = [1, 1]} : vector<6x1024xf32> to vector<1x1024xf32>
    %c0_1 = arith.constant 0 : index
    %c0_2 = arith.constant 0 : index
    %7 = vector.load %arg2[%c0_1, %c0_2] : memref<4x1xf32, #tpu.memory_space<vmem>>, vector<4x1xf32>
    %c0_3 = arith.constant 0 : index
    %c0_4 = arith.constant 0 : index
    %c0_5 = arith.constant 0 : index
    %8 = vector.load %arg1[%c0_3, %c0_4, %c0_5] : memref<3x4x36xbf16, #tpu.memory_space<vmem>>, vector<1x4x36xbf16>
    %9 = vector.shape_cast %8 : vector<1x4x36xbf16> to vector<4x36xbf16>
    %c1 = arith.constant 1 : index
    %c0_6 = arith.constant 0 : index
    %c0_7 = arith.constant 0 : index
    %10 = vector.load %arg1[%c1, %c0_6, %c0_7] : memref<3x4x36xbf16, #tpu.memory_space<vmem>>, vector<1x4x36xbf16>
    %11 = vector.shape_cast %10 : vector<1x4x36xbf16> to vector<4x36xbf16>
    %c2 = arith.constant 2 : index
    %c0_8 = arith.constant 0 : index
    %c0_9 = arith.constant 0 : index
    %12 = vector.load %arg1[%c2, %c0_8, %c0_9] : memref<3x4x36xbf16, #tpu.memory_space<vmem>>, vector<1x4x36xbf16>
    %13 = vector.shape_cast %12 : vector<1x4x36xbf16> to vector<4x36xbf16>
    %c0_10 = arith.constant 0 : index
    %c0_11 = arith.constant 0 : index
    %c0_12 = arith.constant 0 : index
    %14 = vector.load %arg4[%c0_10, %c0_11, %c0_12] : memref<2x4x1024xf32, #tpu.memory_space<vmem>>, vector<1x4x1024xf32>
    %15 = vector.shape_cast %14 : vector<1x4x1024xf32> to vector<4x1024xf32>
    %c1_i32 = arith.constant 1 : i32
    %16 = tpu.dynamic_rotate %15 by %c1_i32 dim 1 : vector<4x1024xf32>, i32 -> vector<4x1024xf32>
    %17 = vector.broadcast %1 : vector<1x1024xf32> to vector<4x1024xf32>
    %18 = arith.mulf %16, %17 : vector<4x1024xf32>
    %c1023_i32 = arith.constant 1023 : i32
    %19 = tpu.dynamic_rotate %15 by %c1023_i32 dim 1 : vector<4x1024xf32>, i32 -> vector<4x1024xf32>
    %20 = vector.broadcast %2 : vector<1x1024xf32> to vector<4x1024xf32>
    %21 = arith.mulf %19, %20 : vector<4x1024xf32>
    %c16_i32 = arith.constant 16 : i32
    %22 = tpu.dynamic_rotate %18 by %c16_i32 dim 1 : vector<4x1024xf32>, i32 -> vector<4x1024xf32>
    %23 = vector.broadcast %3 : vector<1x1024xf32> to vector<4x1024xf32>
    %24 = arith.mulf %22, %23 : vector<4x1024xf32>
    %c16_i32_13 = arith.constant 16 : i32
    %25 = tpu.dynamic_rotate %15 by %c16_i32_13 dim 1 : vector<4x1024xf32>, i32 -> vector<4x1024xf32>
    %26 = vector.broadcast %3 : vector<1x1024xf32> to vector<4x1024xf32>
    %27 = arith.mulf %25, %26 : vector<4x1024xf32>
    %c16_i32_14 = arith.constant 16 : i32
    %28 = tpu.dynamic_rotate %21 by %c16_i32_14 dim 1 : vector<4x1024xf32>, i32 -> vector<4x1024xf32>
    %29 = vector.broadcast %3 : vector<1x1024xf32> to vector<4x1024xf32>
    %30 = arith.mulf %28, %29 : vector<4x1024xf32>
    %c1008_i32 = arith.constant 1008 : i32
    %31 = tpu.dynamic_rotate %18 by %c1008_i32 dim 1 : vector<4x1024xf32>, i32 -> vector<4x1024xf32>
    %32 = vector.broadcast %4 : vector<1x1024xf32> to vector<4x1024xf32>
    %33 = arith.mulf %31, %32 : vector<4x1024xf32>
    %c1008_i32_15 = arith.constant 1008 : i32
    %34 = tpu.dynamic_rotate %15 by %c1008_i32_15 dim 1 : vector<4x1024xf32>, i32 -> vector<4x1024xf32>
    %35 = vector.broadcast %4 : vector<1x1024xf32> to vector<4x1024xf32>
    %36 = arith.mulf %34, %35 : vector<4x1024xf32>
    %c1008_i32_16 = arith.constant 1008 : i32
    %37 = tpu.dynamic_rotate %21 by %c1008_i32_16 dim 1 : vector<4x1024xf32>, i32 -> vector<4x1024xf32>
    %38 = vector.broadcast %4 : vector<1x1024xf32> to vector<4x1024xf32>
    %39 = arith.mulf %37, %38 : vector<4x1024xf32>
    %40 = tpu.concatenate %24, %27, %30, %18, %15, %21, %33, %36, %39 in 0 : vector<4x1024xf32>, vector<4x1024xf32>, vector<4x1024xf32>, vector<4x1024xf32>, vector<4x1024xf32>, vector<4x1024xf32>, vector<4x1024xf32>, vector<4x1024xf32>, vector<4x1024xf32> -> vector<36x1024xf32>
    %41 = arith.truncf %40 : vector<36x1024xf32> to vector<36x1024xbf16>
    %cst = arith.constant dense<0.000000e+00> : vector<4x1024xf32>
    %42 = tpu.matmul %9, %41, %cst {dimension_numbers = #tpu.dot_dimension_numbers<[1], [0], [0], [1], [0, 0, 1, 1], [], []>} : vector<4x36xbf16>, vector<36x1024xbf16>, vector<4x1024xf32> -> vector<4x1024xf32>
    %cst_17 = arith.constant dense<0.000000e+00> : vector<4x1024xf32>
    %43 = tpu.matmul %11, %41, %cst_17 {dimension_numbers = #tpu.dot_dimension_numbers<[1], [0], [0], [1], [0, 0, 1, 1], [], []>} : vector<4x36xbf16>, vector<36x1024xbf16>, vector<4x1024xf32> -> vector<4x1024xf32>
    %cst_18 = arith.constant dense<0.000000e+00> : vector<4x1024xf32>
    %44 = tpu.matmul %13, %41, %cst_18 {dimension_numbers = #tpu.dot_dimension_numbers<[1], [0], [0], [1], [0, 0, 1, 1], [], []>} : vector<4x36xbf16>, vector<36x1024xbf16>, vector<4x1024xf32> -> vector<4x1024xf32>
    %c128_i32 = arith.constant 128 : i32
    %45 = tpu.dynamic_rotate %42 by %c128_i32 dim 1 : vector<4x1024xf32>, i32 -> vector<4x1024xf32>
    %46 = vector.broadcast %5 : vector<1x1024xf32> to vector<4x1024xf32>
    %47 = arith.mulf %46, %45 : vector<4x1024xf32>
    %48 = arith.addf %43, %47 : vector<4x1024xf32>
    %c896_i32 = arith.constant 896 : i32
    %49 = tpu.dynamic_rotate %44 by %c896_i32 dim 1 : vector<4x1024xf32>, i32 -> vector<4x1024xf32>
    %50 = vector.broadcast %6 : vector<1x1024xf32> to vector<4x1024xf32>
    %51 = arith.mulf %50, %49 : vector<4x1024xf32>
    %52 = arith.addf %48, %51 : vector<4x1024xf32>
    %53 = vector.broadcast %7 : vector<4x1xf32> to vector<4x1024xf32>
    %54 = arith.addf %52, %53 : vector<4x1024xf32>
    %cst_19 = arith.constant 0.000000e+00 : f32
    %55 = vector.broadcast %cst_19 : f32 to vector<4x1024xf32>
    %56 = arith.cmpf ogt, %54, %55 : vector<4x1024xf32>
    %cst_20 = arith.constant 0.00999999977 : f32
    %57 = vector.broadcast %cst_20 : f32 to vector<4x1024xf32>
    %58 = arith.mulf %57, %54 : vector<4x1024xf32>
    %59 = arith.select %56, %54, %58 : vector<4x1024xi1>, vector<4x1024xf32>
    %60 = arith.addf %59, %15 : vector<4x1024xf32>
    %c0_21 = arith.constant 0 : index
    %c0_22 = arith.constant 0 : index
    %c0_23 = arith.constant 0 : index
    %61 = vector.load %arg5[%c0_21, %c0_22, %c0_23] : memref<2x4x1024xf32, #tpu.memory_space<vmem>>, vector<1x4x1024xf32>
    %62 = vector.shape_cast %61 : vector<1x4x1024xf32> to vector<4x1024xf32>
    %63 = vector.shape_cast %60 : vector<4x1024xf32> to vector<1x4x1024xf32>
    tpu.vector_store %arg5[%c0_21, %c0_22, %c0_23], %63 {strides = array<i32>} : memref<2x4x1024xf32, #tpu.memory_space<vmem>>, vector<1x4x1024xf32>,
    %c1_24 = arith.constant 1 : index
    %c0_25 = arith.constant 0 : index
    %c0_26 = arith.constant 0 : index
    %64 = vector.load %arg4[%c1_24, %c0_25, %c0_26] : memref<2x4x1024xf32, #tpu.memory_space<vmem>>, vector<1x4x1024xf32>
    %65 = vector.shape_cast %64 : vector<1x4x1024xf32> to vector<4x1024xf32>
    %c1_i32_27 = arith.constant 1 : i32
    %66 = tpu.dynamic_rotate %65 by %c1_i32_27 dim 1 : vector<4x1024xf32>, i32 -> vector<4x1024xf32>
    %67 = vector.broadcast %1 : vector<1x1024xf32> to vector<4x1024xf32>
    %68 = arith.mulf %66, %67 : vector<4x1024xf32>
    %c1023_i32_28 = arith.constant 1023 : i32
    %69 = tpu.dynamic_rotate %65 by %c1023_i32_28 dim 1 : vector<4x1024xf32>, i32 -> vector<4x1024xf32>
    %70 = vector.broadcast %2 : vector<1x1024xf32> to vector<4x1024xf32>
    %71 = arith.mulf %69, %70 : vector<4x1024xf32>
    %c16_i32_29 = arith.constant 16 : i32
    %72 = tpu.dynamic_rotate %68 by %c16_i32_29 dim 1 : vector<4x1024xf32>, i32 -> vector<4x1024xf32>
    %73 = vector.broadcast %3 : vector<1x1024xf32> to vector<4x1024xf32>
    %74 = arith.mulf %72, %73 : vector<4x1024xf32>
    %c16_i32_30 = arith.constant 16 : i32
    %75 = tpu.dynamic_rotate %65 by %c16_i32_30 dim 1 : vector<4x1024xf32>, i32 -> vector<4x1024xf32>
    %76 = vector.broadcast %3 : vector<1x1024xf32> to vector<4x1024xf32>
    %77 = arith.mulf %75, %76 : vector<4x1024xf32>
    %c16_i32_31 = arith.constant 16 : i32
    %78 = tpu.dynamic_rotate %71 by %c16_i32_31 dim 1 : vector<4x1024xf32>, i32 -> vector<4x1024xf32>
    %79 = vector.broadcast %3 : vector<1x1024xf32> to vector<4x1024xf32>
    %80 = arith.mulf %78, %79 : vector<4x1024xf32>
    %c1008_i32_32 = arith.constant 1008 : i32
    %81 = tpu.dynamic_rotate %68 by %c1008_i32_32 dim 1 : vector<4x1024xf32>, i32 -> vector<4x1024xf32>
    %82 = vector.broadcast %4 : vector<1x1024xf32> to vector<4x1024xf32>
    %83 = arith.mulf %81, %82 : vector<4x1024xf32>
    %c1008_i32_33 = arith.constant 1008 : i32
    %84 = tpu.dynamic_rotate %65 by %c1008_i32_33 dim 1 : vector<4x1024xf32>, i32 -> vector<4x1024xf32>
    %85 = vector.broadcast %4 : vector<1x1024xf32> to vector<4x1024xf32>
    %86 = arith.mulf %84, %85 : vector<4x1024xf32>
    %c1008_i32_34 = arith.constant 1008 : i32
    %87 = tpu.dynamic_rotate %71 by %c1008_i32_34 dim 1 : vector<4x1024xf32>, i32 -> vector<4x1024xf32>
    %88 = vector.broadcast %4 : vector<1x1024xf32> to vector<4x1024xf32>
    %89 = arith.mulf %87, %88 : vector<4x1024xf32>
    %90 = tpu.concatenate %74, %77, %80, %68, %65, %71, %83, %86, %89 in 0 : vector<4x1024xf32>, vector<4x1024xf32>, vector<4x1024xf32>, vector<4x1024xf32>, vector<4x1024xf32>, vector<4x1024xf32>, vector<4x1024xf32>, vector<4x1024xf32>, vector<4x1024xf32> -> vector<36x1024xf32>
    %91 = arith.truncf %90 : vector<36x1024xf32> to vector<36x1024xbf16>
    %cst_35 = arith.constant dense<0.000000e+00> : vector<4x1024xf32>
    %92 = tpu.matmul %9, %91, %cst_35 {dimension_numbers = #tpu.dot_dimension_numbers<[1], [0], [0], [1], [0, 0, 1, 1], [], []>} : vector<4x36xbf16>, vector<36x1024xbf16>, vector<4x1024xf32> -> vector<4x1024xf32>
    %cst_36 = arith.constant dense<0.000000e+00> : vector<4x1024xf32>
    %93 = tpu.matmul %11, %91, %cst_36 {dimension_numbers = #tpu.dot_dimension_numbers<[1], [0], [0], [1], [0, 0, 1, 1], [], []>} : vector<4x36xbf16>, vector<36x1024xbf16>, vector<4x1024xf32> -> vector<4x1024xf32>
    %cst_37 = arith.constant dense<0.000000e+00> : vector<4x1024xf32>
    %94 = tpu.matmul %13, %91, %cst_37 {dimension_numbers = #tpu.dot_dimension_numbers<[1], [0], [0], [1], [0, 0, 1, 1], [], []>} : vector<4x36xbf16>, vector<36x1024xbf16>, vector<4x1024xf32> -> vector<4x1024xf32>
    %c128_i32_38 = arith.constant 128 : i32
    %95 = tpu.dynamic_rotate %92 by %c128_i32_38 dim 1 : vector<4x1024xf32>, i32 -> vector<4x1024xf32>
    %96 = vector.broadcast %5 : vector<1x1024xf32> to vector<4x1024xf32>
    %97 = arith.mulf %96, %95 : vector<4x1024xf32>
    %98 = arith.addf %93, %97 : vector<4x1024xf32>
    %c896_i32_39 = arith.constant 896 : i32
    %99 = tpu.dynamic_rotate %94 by %c896_i32_39 dim 1 : vector<4x1024xf32>, i32 -> vector<4x1024xf32>
    %100 = vector.broadcast %6 : vector<1x1024xf32> to vector<4x1024xf32>
    %101 = arith.mulf %100, %99 : vector<4x1024xf32>
    %102 = arith.addf %98, %101 : vector<4x1024xf32>
    %103 = vector.broadcast %7 : vector<4x1xf32> to vector<4x1024xf32>
    %104 = arith.addf %102, %103 : vector<4x1024xf32>
    %cst_40 = arith.constant 0.000000e+00 : f32
    %105 = vector.broadcast %cst_40 : f32 to vector<4x1024xf32>
    %106 = arith.cmpf ogt, %104, %105 : vector<4x1024xf32>
    %cst_41 = arith.constant 0.00999999977 : f32
    %107 = vector.broadcast %cst_41 : f32 to vector<4x1024xf32>
    %108 = arith.mulf %107, %104 : vector<4x1024xf32>
    %109 = arith.select %106, %104, %108 : vector<4x1024xi1>, vector<4x1024xf32>
    %110 = arith.addf %109, %65 : vector<4x1024xf32>
    %c1_42 = arith.constant 1 : index
    %c0_43 = arith.constant 0 : index
    %c0_44 = arith.constant 0 : index
    %111 = vector.load %arg5[%c1_42, %c0_43, %c0_44] : memref<2x4x1024xf32, #tpu.memory_space<vmem>>, vector<1x4x1024xf32>
    %112 = vector.shape_cast %111 : vector<1x4x1024xf32> to vector<4x1024xf32>
    %113 = vector.shape_cast %110 : vector<4x1024xf32> to vector<1x4x1024xf32>
    tpu.vector_store %arg5[%c1_42, %c0_43, %c0_44], %113 {strides = array<i32>} : memref<2x4x1024xf32, #tpu.memory_space<vmem>>, vector<1x4x1024xf32>,
    return
  }
  func.func @transform_0(%arg0: i32) -> (i32, i32, i32) {
    %c0_i32 = arith.constant 0 : i32
    %c0_i32_0 = arith.constant 0 : i32
    %c0_i32_1 = arith.constant 0 : i32
    %c0_i32_2 = arith.constant 0 : i32
    return %c0_i32, %c0_i32_0, %c0_i32_1 : i32, i32, i32
  }
  func.func @transform_1(%arg0: i32) -> (i32, i32) {
    %c0_i32 = arith.constant 0 : i32
    %c0_i32_0 = arith.constant 0 : i32
    %c0_i32_1 = arith.constant 0 : i32
    return %c0_i32, %c0_i32_0 : i32, i32
  }
  func.func @transform_2(%arg0: i32) -> (i32, i32) {
    %c0_i32 = arith.constant 0 : i32
    %c0_i32_0 = arith.constant 0 : i32
    %c0_i32_1 = arith.constant 0 : i32
    return %c0_i32, %c0_i32_0 : i32, i32
  }
  func.func @transform_3(%arg0: i32) -> (i32, i32, i32) {
    %c0_i32 = arith.constant 0 : i32
    %c0_i32_0 = arith.constant 0 : i32
    %c0_i32_1 = arith.constant 0 : i32
    return %arg0, %c0_i32, %c0_i32_0 : i32, i32, i32
  }
  func.func @transform_4(%arg0: i32) -> (i32, i32, i32) {
    %c0_i32 = arith.constant 0 : i32
    %c0_i32_0 = arith.constant 0 : i32
    %c0_i32_1 = arith.constant 0 : i32
    return %arg0, %c0_i32, %c0_i32_0 : i32, i32, i32
  }
}

</mosaic_0001>

<llo_original>
// kernel: tpu_custom_call.1
$region0: #{tpu_custom_call.1}
  #allocation0 [shape = 'u32[]', space=smem, size = 0x4, offset = 0x4, fixed_abs, tag = 'smem constant byte address 0x4 - core index']
  #allocation1 [shape = 'u32[144,128]{1,0:T(1,128)}', space=vmem, size = 0x12000, scoped, tag = 'internal scratch']
  %s0 = inlined_call_operand.hbm [shape: bf16[3,4,36], index: 0, kind: input, shape index: {}]
  %s1 = inlined_call_operand.vmem [shape: f32[4,1], index: 1, kind: input, shape index: {}]
  %s2 = inlined_call_operand.hbm [shape: f32[6,1024], index: 2, kind: input, shape index: {}]
  %s3 = inlined_call_operand.hbm [shape: f32[4,4,1024], index: 3, kind: input, shape index: {}]
  %s4 = inlined_call_operand.hbm [shape: f32[4,4,1024], index: 4, kind: output, shape index: {}]
  %s5 = sld [smem:[#allocation0]]
  $region61: #{tpu_custom_call.1} parent=0
    _
  %s7 = ssub.s32 1, %s5
  %s8 = scalar_select 0, %s7, %s5
  $region1: #{tpu_custom_call.1} parent=0
    #allocation2 [shape = 'u8[3072]{0}', space=vmem, size = 0xc00, scoped, tag = 'input window, operand 0, single buffered']
    #allocation3 [shape = 's32[2]{0}', space=sflag, size = 0x8, scoped, tag = 'scoped memory for tpu_custom_call.1']
    #allocation4 [shape = 's32[2]{0}', space=sflag, size = 0x8, scoped, tag = 'scoped memory for tpu_custom_call.1']
    #allocation5 [shape = 'u8[32768]{0}', space=vmem, size = 0x8000, scoped, tag = 'input window, operand 2, single buffered']
    #allocation6 [shape = 's32[1]{0}', space=sflag, size = 0x4, scoped, tag = 'scoped memory for tpu_custom_call.1']
    #allocation7 [shape = 'u8[65536]{0}', space=vmem, size = 0x10000, scoped, tag = 'input window, operand 3']
    #allocation8 [shape = 'u8[65536]{0}', space=vmem, size = 0x10000, scoped, tag = 'output window, operand 0']
    %9 = vsyncpa [#allocation3], 0
    %10 = vsyncpa [#allocation6], 0
    %11 = vsyncpa [#allocation4], 0
    %s12 = scalar_lea.sflag [#allocation4], 1
    %13 = vsyncpa %s12, 0
    loop: start=0, step=1, limit=4
    $region2: #{tpu_custom_call.1} parent=1 // loop_pre_header
      _
    $region3: #{tpu_custom_call.1} parent=1 // loop_header
      %s15 = sphi 0, %s19
      %p16 = scmp.ge.s32.totalorder %s15, 4
      %s23 = sphi 0, %s23
      %s25 = sphi 0, %s23
      %s26 = sphi 0, %s25
      %s40 = sphi 0, %s26
      %s44 = sphi 0, %s44
      %s46 = sphi 0, %s44
      %s47 = sphi 0, %s46
      %s61 = sphi 0, %s47
      %s65 = sphi 0, %s65
      %s67 = sphi 0, %s65
      %s68 = sphi 0, %s67
      %s82 = sphi 0, %s68
      %s88 = sphi 0, %s90
      %s91 = sphi 0, %s88
      %s92 = sphi 0, %s91
      %s108 = sphi 0, %s92
      %s114 = sphi 0, %s116
      %s117 = sphi 0, %s114
      %s118 = sphi 0, %s117
      %s134 = sphi 0, %s118
    $region4: #{tpu_custom_call.1} parent=1 // loop_header_branch
      %18 = sbr.rel (%p16) target = $region8
    $region5: #{tpu_custom_call.1} parent=1 // loop_body
      %s20 = ssub.s32 %s15, 1
      %s21 = ssub.s32 %s15, 2
      %s22 = sadd.s32 %s15, 1
      %s24 = sadd.s32 %s23, 1
      %p27 = scmp.eq.s32.totalorder %s15, 1
      %p28 = scmp.ne.s32.totalorder %s23, %s25
      %p29 = scmp.eq.s32.totalorder %s15, 0
      %p30 = por %p28, %p29
      %p31 = scmp.ne.s32.totalorder %s23, %s25
      %p32 = scmp.eq.s32.totalorder %s20, 1
      %p33 = por %p31, %p32
      %p34 = scmp.ne.s32.totalorder %s25, %s26
      %p35 = scmp.eq.s32.totalorder %s20, 0
      %p36 = por %p34, %p35
      %p37 = scmp.ne.s32.totalorder %s25, %s26
      %p38 = scmp.eq.s32.totalorder %s21, 1
      %p39 = por %p37, %p38
      %p41 = scmp.ne.s32.totalorder %s26, %s40
      %p42 = scmp.eq.s32.totalorder %s21, 0
      %p43 = por %p41, %p42
      %s45 = sadd.s32 %s44, 1
      %p48 = scmp.eq.s32.totalorder %s15, 1
      %p49 = scmp.ne.s32.totalorder %s44, %s46
      %p50 = scmp.eq.s32.totalorder %s15, 0
      %p51 = por %p49, %p50
      %p52 = scmp.ne.s32.totalorder %s44, %s46
      %p53 = scmp.eq.s32.totalorder %s20, 1
      %p54 = por %p52, %p53
      %p55 = scmp.ne.s32.totalorder %s46, %s47
      %p56 = scmp.eq.s32.totalorder %s20, 0
      %p57 = por %p55, %p56
      %p58 = scmp.ne.s32.totalorder %s46, %s47
      %p59 = scmp.eq.s32.totalorder %s21, 1
      %p60 = por %p58, %p59
      %p62 = scmp.ne.s32.totalorder %s47, %s61
      %p63 = scmp.eq.s32.totalorder %s21, 0
      %p64 = por %p62, %p63
      %s66 = sadd.s32 %s65, 1
      %p69 = scmp.eq.s32.totalorder %s15, 1
      %p70 = scmp.ne.s32.totalorder %s65, %s67
      %p71 = scmp.eq.s32.totalorder %s15, 0
      %p72 = por %p70, %p71
      %p73 = scmp.ne.s32.totalorder %s65, %s67
      %p74 = scmp.eq.s32.totalorder %s20, 1
      %p75 = por %p73, %p74
      %p76 = scmp.ne.s32.totalorder %s67, %s68
      %p77 = scmp.eq.s32.totalorder %s20, 0
      %p78 = por %p76, %p77
      %p79 = scmp.ne.s32.totalorder %s67, %s68
      %p80 = scmp.eq.s32.totalorder %s21, 1
      %p81 = por %p79, %p80
      %p83 = scmp.ne.s32.totalorder %s68, %s82
      %p84 = scmp.eq.s32.totalorder %s21, 0
      %p85 = por %p83, %p84
      %s86 = ssub.s32 %s15, %s22
      %p87 = scmp.eq.s32.totalorder %s86, 0
      %s89 = sadd.s32 %s88, 1
      %s90 = scalar_select %p87, %s88, %s89
      %p93 = pneg %p87
      %p94 = scmp.eq.s32.totalorder %s15, 1
      %p95 = por %p93, %p94
      %p96 = scmp.ne.s32.totalorder %s88, %s91
      %p97 = scmp.eq.s32.totalorder %s15, 0
      %p98 = por %p96, %p97
      %p99 = scmp.ne.s32.totalorder %s88, %s91
      %p100 = scmp.eq.s32.totalorder %s20, 1
      %p101 = por %p99, %p100
      %p102 = scmp.ne.s32.totalorder %s91, %s92
      %p103 = scmp.eq.s32.totalorder %s20, 0
      %p104 = por %p102, %p103
      %p105 = scmp.ne.s32.totalorder %s91, %s92
      %p106 = scmp.eq.s32.totalorder %s21, 1
      %p107 = por %p105, %p106
      %p109 = scmp.ne.s32.totalorder %s92, %s108
      %p110 = scmp.eq.s32.totalorder %s21, 0
      %p111 = por %p109, %p110
      %s112 = ssub.s32 %s15, %s22
      %p113 = scmp.eq.s32.totalorder %s112, 0
      %s115 = sadd.s32 %s114, 1
      %s116 = scalar_select %p113, %s114, %s115
      %p119 = pneg %p113
      %p120 = scmp.eq.s32.totalorder %s15, 1
      %p121 = por %p119, %p120
      %p122 = scmp.ne.s32.totalorder %s114, %s117
      %p123 = scmp.eq.s32.totalorder %s15, 0
      %p124 = por %p122, %p123
      %p125 = scmp.ne.s32.totalorder %s114, %s117
      %p126 = scmp.eq.s32.totalorder %s20, 1
      %p127 = por %p125, %p126
      %p128 = scmp.ne.s32.totalorder %s117, %s118
      %p129 = scmp.eq.s32.totalorder %s20, 0
      %p130 = por %p128, %p129
      %p131 = scmp.ne.s32.totalorder %s117, %s118
      %p132 = scmp.eq.s32.totalorder %s21, 1
      %p133 = por %p131, %p132
      %p135 = scmp.ne.s32.totalorder %s118, %s134
      %p136 = scmp.eq.s32.totalorder %s21, 0
      %p137 = por %p135, %p136
      %p138 = scmp.le.s32.totalorder 1, %s15
      %p139 = scmp.lt.s32.totalorder %s15, 3
      %p140 = pnand %p138, %p139
      %p141 = pneg %p140
      // Predicated region
      $region9: #{tpu_custom_call.1} parent=5 // pred_check
        _
      $region10: #{tpu_custom_call.1} parent=5 // pred_check_branch
        %143 = sbr.rel (%p140) target = $region12
      $region11: #{tpu_custom_call.1} parent=5 // pred_region
        %s144 = ssub.s32 %s15, 1
        // Predicated region
        $region13: #{tpu_custom_call.1} parent=11 // pred_check
          %p145 = pneg %p36
        $region14: #{tpu_custom_call.1} parent=11 // pred_check_branch
          %147 = sbr.rel (%p145) target = $region16
        $region15: #{tpu_custom_call.1} parent=11 // pred_region
          %s149 = ssub.s32 96, 96
          %150 = vsyncadd [#allocation3], %s149
          %s151 = sshll.u32 [#allocation2], 4
          %s152 = int_to_ptr.vmem [resolvable:$true] %s151
          %157 = dma.hbm_to_vmem [thread:$0]  %s0, 96, %s152, [#allocation3], 32, 32, 2
        $region16: #{tpu_custom_call.1} parent=11 // pred_fallthru
          _
        // Predicated region
        $region17: #{tpu_custom_call.1} parent=11 // pred_check
          %p158 = pneg %p57
        $region18: #{tpu_custom_call.1} parent=11 // pred_check_branch
          %160 = sbr.rel (%p158) target = $region20
        $region19: #{tpu_custom_call.1} parent=11 // pred_region
          _
        $region20: #{tpu_custom_call.1} parent=11 // pred_fallthru
          _
        // Predicated region
        $region21: #{tpu_custom_call.1} parent=11 // pred_check
          %p161 = pneg %p78
        $region22: #{tpu_custom_call.1} parent=11 // pred_check_branch
          %163 = sbr.rel (%p161) target = $region24
        $region23: #{tpu_custom_call.1} parent=11 // pred_region
          %s165 = ssub.s32 1024, 1024
          %166 = vsyncadd [#allocation6], %s165
          %s168 = sshll.u32 [#allocation5], 4
          %s169 = int_to_ptr.vmem [resolvable:$true] %s168
          %171 = dma.hbm_to_vmem [thread:$0]  %s2, 1024, %s169, [#allocation6]
        $region24: #{tpu_custom_call.1} parent=11 // pred_fallthru
          _
      $region12: #{tpu_custom_call.1} parent=5 // pred_fallthru
        _
      %p172 = scmp.lt.s32.totalorder %s15, 2
      // Predicated region
      $region25: #{tpu_custom_call.1} parent=5 // pred_check
        %p173 = pneg %p172
      $region26: #{tpu_custom_call.1} parent=5 // pred_check_branch
        %175 = sbr.rel (%p173) target = $region28
      $region27: #{tpu_custom_call.1} parent=5 // pred_region
        // Predicated region
        $region29: #{tpu_custom_call.1} parent=27 // pred_check
          %p176 = pneg %p98
        $region30: #{tpu_custom_call.1} parent=27 // pred_check_branch
          %178 = sbr.rel (%p176) target = $region32
        $region31: #{tpu_custom_call.1} parent=27 // pred_region
          %s179 = sand.u32 %s15, 1
          %s180 = scalar_lea.sflag [#allocation3], %s179
          %s181 = sand.u32 %s88, 1
          %s182 = smul.addr %s181, 64
          %s183 = scalar_lea.vmem [#allocation7], %s182
          %s184 = smul.u32 2, %s15
          %s186 = ssub.s32 1024, 1024
          %187 = vsyncadd %s180, %s186
          %s188 = smul.addr %s184, 8
          %s189 = smul.addr %s188, 64
          %s190 = scalar_lea.hbm %s3, %s189
          %s191 = sshll.u32 %s183, 4
          %s192 = int_to_ptr.vmem [resolvable:$true] %s191
          %197 = dma.hbm_to_vmem [thread:$0]  %s190, 1024, %s192, %s180, 512, 512, 32
        $region32: #{tpu_custom_call.1} parent=27 // pred_fallthru
          _
      $region28: #{tpu_custom_call.1} parent=5 // pred_fallthru
        _
      %p198 = scmp.le.s32.totalorder 1, %s15
      %p199 = scmp.lt.s32.totalorder %s15, 3
      %p200 = pnand %p198, %p199
      %p201 = pneg %p200
      // Predicated region
      $region33: #{tpu_custom_call.1} parent=5 // pred_check
        _
      $region34: #{tpu_custom_call.1} parent=5 // pred_check_branch
        %203 = sbr.rel (%p200) target = $region36
      $region35: #{tpu_custom_call.1} parent=5 // pred_region
        %s204 = ssub.s32 %s15, 1
        // Predicated region
        $region37: #{tpu_custom_call.1} parent=35 // pred_check
          %p205 = pneg %p36
        $region38: #{tpu_custom_call.1} parent=35 // pred_check_branch
          %207 = sbr.rel (%p205) target = $region40
        $region39: #{tpu_custom_call.1} parent=35 // pred_region
          %208 = dma.done [#allocation3], 96
        $region40: #{tpu_custom_call.1} parent=35 // pred_fallthru
          _
        // Predicated region
        $region41: #{tpu_custom_call.1} parent=35 // pred_check
          %p209 = pneg %p78
        $region42: #{tpu_custom_call.1} parent=35 // pred_check_branch
          %211 = sbr.rel (%p209) target = $region44
        $region43: #{tpu_custom_call.1} parent=35 // pred_region
          %212 = dma.done [#allocation6], 1024
        $region44: #{tpu_custom_call.1} parent=35 // pred_fallthru
          _
        %s213 = sand.u32 %s20, 1
        %s214 = scalar_lea.sflag [#allocation3], %s213
        %s215 = sand.u32 %s91, 1
        %s216 = smul.addr %s215, 64
        %s217 = scalar_lea.vmem [#allocation7], %s216
        // Predicated region
        $region45: #{tpu_custom_call.1} parent=35 // pred_check
          %p218 = pneg %p104
        $region46: #{tpu_custom_call.1} parent=35 // pred_check_branch
          %220 = sbr.rel (%p218) target = $region48
        $region47: #{tpu_custom_call.1} parent=35 // pred_region
          %221 = dma.done %s214, 1024
        $region48: #{tpu_custom_call.1} parent=35 // pred_fallthru
          _
        %p222 = pneg %p36
        %p223 = pneg %p33
        %p224 = pneg %p57
        %p225 = pneg %p54
        %p226 = pneg %p78
        %p227 = pneg %p75
        %s228 = sand.u32 %s20, 1
        %s229 = scalar_lea.sflag [#allocation3], %s228
        %s230 = sand.u32 %s91, 1
        %s231 = smul.addr %s230, 64
        %s232 = scalar_lea.vmem [#allocation7], %s231
        %p233 = pneg %p104
        %p234 = pneg %p101
        %p235 = pneg %p130
        %p236 = pneg %p127
        %s237 = sand.u32 %s117, 1
        %s238 = scalar_lea.sflag [#allocation4], %s237
        %s239 = sand.u32 %s117, 1
        %s240 = smul.addr %s239, 64
        %s241 = scalar_lea.vmem [#allocation8], %s240
        %s242 = smul.u32 2, %s20
        %s243 = smul.u32 2, %s20
        %v245 = vld [vmem:[#allocation5] sm:$0x3f]
        %v246 = vld [vmem:[#allocation5 + $0x8] sm:$0x3f]
        %v247 = vld [vmem:[#allocation5 + $0x10] sm:$0x3f]
        %v248 = vld [vmem:[#allocation5 + $0x18] sm:$0x3f]
        %v249 = vld [vmem:[#allocation5 + $0x20] sm:$0x3f]
        %v250 = vld [vmem:[#allocation5 + $0x28] sm:$0x3f]
        %v251 = vld [vmem:[#allocation5 + $0x30] sm:$0x3f]
        %v252 = vld [vmem:[#allocation5 + $0x38] sm:$0x3f]
        %v253 = vld [vmem:[%s1] sm:$0xf]
        %v254 = vld [vmem:[#allocation2] sm:$0x3]
        %s255 = scalar_lea.vmem [#allocation2], 2
        %v256 = vld [vmem:[%s255] sm:$0x3]
        %s257 = scalar_lea.vmem [#allocation2], 4
        %v258 = vld [vmem:[%s257] sm:$0x3]
        %v259 = vld [vmem:[%s217] sm:$0xff]
        %v260 = vld [vmem:[%s217 + $0x8] sm:$0xff]
        %v261 = vld [vmem:[%s217 + $0x10] sm:$0xff]
        %v262 = vld [vmem:[%s217 + $0x18] sm:$0xff]
        %v267 = vcombine.high %v259, %v259
        %v268 = vcombine.high %v260, %v260
        %v269 = vcombine.high %v261, %v261
        %v270 = vcombine.high %v262, %v262
        %275 = vrot.lane.b32.xlu0 %v259, 1
        %v276 = vpop.permute.xlu0 %275
        %277 = vrot.lane.b32.xlu0 %v267, 1
        %v278 = vpop.permute.xlu0 %277
        %279 = vrot.lane.b32.xlu0 %v260, 1
        %v280 = vpop.permute.xlu0 %279
        %281 = vrot.lane.b32.xlu0 %v268, 1
        %v282 = vpop.permute.xlu0 %281
        %283 = vrot.lane.b32.xlu0 %v261, 1
        %v284 = vpop.permute.xlu0 %283
        %285 = vrot.lane.b32.xlu0 %v269, 1
        %v286 = vpop.permute.xlu0 %285
        %287 = vrot.lane.b32.xlu0 %v262, 1
        %v288 = vpop.permute.xlu0 %287
        %289 = vrot.lane.b32.xlu0 %v270, 1
        %v290 = vpop.permute.xlu0 %289
        %v291 = vlaneseq
        %v292 = vand.u32 %v291, 127
        %vm293 = vcmp.lt.s32.totalorder %v292, 1
        %v294 = vsel %vm293, %v288, %v290
        %v295 = vsel %vm293, %v286, %v288
        %v296 = vsel %vm293, %v284, %v286
        %v297 = vsel %vm293, %v282, %v284
        %v298 = vsel %vm293, %v280, %v282
        %v299 = vsel %vm293, %v278, %v280
        %v300 = vsel %vm293, %v276, %v278
        %v301 = vsel %vm293, %v290, %v276
        %v302 = vlaneseq
        %v303 = vshrl.u32 %v302, 7
        %v304 = vsub.s32 0, %v303
        %v305 = vrot.slane %v245, %v304
        %v306 = vlaneseq
        %v307 = vshrl.u32 %v306, 7
        %v308 = vsub.s32 0, %v307
        %v309 = vrot.slane %v246, %v308
        %v310 = vlaneseq
        %v311 = vshrl.u32 %v310, 7
        %v312 = vsub.s32 0, %v311
        %v313 = vrot.slane %v247, %v312
        %v314 = vlaneseq
        %v315 = vshrl.u32 %v314, 7
        %v316 = vsub.s32 0, %v315
        %v317 = vrot.slane %v248, %v316
        %v318 = vlaneseq
        %v319 = vshrl.u32 %v318, 7
        %v320 = vsub.s32 0, %v319
        %v321 = vrot.slane %v249, %v320
        %v322 = vlaneseq
        %v323 = vshrl.u32 %v322, 7
        %v324 = vsub.s32 0, %v323
        %v325 = vrot.slane %v250, %v324
        %v326 = vlaneseq
        %v327 = vshrl.u32 %v326, 7
        %v328 = vsub.s32 0, %v327
        %v329 = vrot.slane %v251, %v328
        %v330 = vlaneseq
        %v331 = vshrl.u32 %v330, 7
        %v332 = vsub.s32 0, %v331
        %v333 = vrot.slane %v252, %v332
        %v334 = vmul.f32 %v301, %v305
        %v335 = vmul.f32 %v300, %v309
        %v336 = vmul.f32 %v299, %v313
        %v337 = vmul.f32 %v298, %v317
        %v338 = vmul.f32 %v297, %v321
        %v339 = vmul.f32 %v296, %v325
        %v340 = vmul.f32 %v295, %v329
        %v341 = vmul.f32 %v294, %v333
        %342 = vrot.lane.b32.xlu0 %v259, 127
        %v343 = vpop.permute.xlu0 %342
        %344 = vrot.lane.b32.xlu0 %v267, 127
        %v345 = vpop.permute.xlu0 %344
        %346 = vrot.lane.b32.xlu0 %v260, 127
        %v347 = vpop.permute.xlu0 %346
        %348 = vrot.lane.b32.xlu0 %v268, 127
        %v349 = vpop.permute.xlu0 %348
        %350 = vrot.lane.b32.xlu0 %v261, 127
        %v351 = vpop.permute.xlu0 %350
        %352 = vrot.lane.b32.xlu0 %v269, 127
        %v353 = vpop.permute.xlu0 %352
        %354 = vrot.lane.b32.xlu0 %v262, 127
        %v355 = vpop.permute.xlu0 %354
        %356 = vrot.lane.b32.xlu0 %v270, 127
        %v357 = vpop.permute.xlu0 %356
        %vm358 = vcmp.lt.s32.totalorder %v292, 127
        %v359 = vsel %vm358, %v355, %v357
        %v360 = vsel %vm358, %v353, %v355
        %v361 = vsel %vm358, %v351, %v353
        %v362 = vsel %vm358, %v349, %v351
        %v363 = vsel %vm358, %v347, %v349
        %v364 = vsel %vm358, %v345, %v347
        %v365 = vsel %vm358, %v343, %v345
        %v366 = vsel %vm358, %v357, %v343
        %v367 = vlaneseq
        %v368 = vshrl.u32 %v367, 7
        %v369 = vsub.s32 1, %v368
        %v370 = vrot.slane %v245, %v369
        %v371 = vlaneseq
        %v372 = vshrl.u32 %v371, 7
        %v373 = vsub.s32 1, %v372
        %v374 = vrot.slane %v246, %v373
        %v375 = vlaneseq
        %v376 = vshrl.u32 %v375, 7
        %v377 = vsub.s32 1, %v376
        %v378 = vrot.slane %v247, %v377
        %v379 = vlaneseq
        %v380 = vshrl.u32 %v379, 7
        %v381 = vsub.s32 1, %v380
        %v382 = vrot.slane %v248, %v381
        %v383 = vlaneseq
        %v384 = vshrl.u32 %v383, 7
        %v385 = vsub.s32 1, %v384
        %v386 = vrot.slane %v249, %v385
        %v387 = vlaneseq
        %v388 = vshrl.u32 %v387, 7
        %v389 = vsub.s32 1, %v388
        %v390 = vrot.slane %v250, %v389
        %v391 = vlaneseq
        %v392 = vshrl.u32 %v391, 7
        %v393 = vsub.s32 1, %v392
        %v394 = vrot.slane %v251, %v393
        %v395 = vlaneseq
        %v396 = vshrl.u32 %v395, 7
        %v397 = vsub.s32 1, %v396
        %v398 = vrot.slane %v252, %v397
        %v399 = vmul.f32 %v365, %v370
        %v400 = vmul.f32 %v364, %v374
        %v401 = vmul.f32 %v363, %v378
        %v402 = vmul.f32 %v362, %v382
        %v403 = vmul.f32 %v361, %v386
        %v404 = vmul.f32 %v360, %v390
        %v405 = vmul.f32 %v359, %v394
        %v406 = vmul.f32 %v366, %v398
        %407 = vrot.lane.b32.xlu0 %v334, 16
        %v408 = vpop.permute.xlu0 %407
        %409 = vrot.lane.b32.xlu0 %v335, 16
        %v410 = vpop.permute.xlu0 %409
        %411 = vrot.lane.b32.xlu0 %v336, 16
        %v412 = vpop.permute.xlu0 %411
        %413 = vrot.lane.b32.xlu0 %v337, 16
        %v414 = vpop.permute.xlu0 %413
        %415 = vrot.lane.b32.xlu0 %v338, 16
        %v416 = vpop.permute.xlu0 %415
        %417 = vrot.lane.b32.xlu0 %v339, 16
        %v418 = vpop.permute.xlu0 %417
        %419 = vrot.lane.b32.xlu0 %v340, 16
        %v420 = vpop.permute.xlu0 %419
        %421 = vrot.lane.b32.xlu0 %v341, 16
        %v422 = vpop.permute.xlu0 %421
        %vm423 = vcmp.lt.s32.totalorder %v292, 16
        %v424 = vsel %vm423, %v420, %v422
        %v425 = vsel %vm423, %v418, %v420
        %v426 = vsel %vm423, %v416, %v418
        %v427 = vsel %vm423, %v414, %v416
        %v428 = vsel %vm423, %v412, %v414
        %v429 = vsel %vm423, %v410, %v412
        %v430 = vsel %vm423, %v408, %v410
        %v431 = vsel %vm423, %v422, %v408
        %v432 = vlaneseq
        %v433 = vshrl.u32 %v432, 7
        %v434 = vsub.s32 2, %v433
        %v435 = vrot.slane %v245, %v434
        %v436 = vlaneseq
        %v437 = vshrl.u32 %v436, 7
        %v438 = vsub.s32 2, %v437
        %v439 = vrot.slane %v246, %v438
        %v440 = vlaneseq
        %v441 = vshrl.u32 %v440, 7
        %v442 = vsub.s32 2, %v441
        %v443 = vrot.slane %v247, %v442
        %v444 = vlaneseq
        %v445 = vshrl.u32 %v444, 7
        %v446 = vsub.s32 2, %v445
        %v447 = vrot.slane %v248, %v446
        %v448 = vlaneseq
        %v449 = vshrl.u32 %v448, 7
        %v450 = vsub.s32 2, %v449
        %v451 = vrot.slane %v249, %v450
        %v452 = vlaneseq
        %v453 = vshrl.u32 %v452, 7
        %v454 = vsub.s32 2, %v453
        %v455 = vrot.slane %v250, %v454
        %v456 = vlaneseq
        %v457 = vshrl.u32 %v456, 7
        %v458 = vsub.s32 2, %v457
        %v459 = vrot.slane %v251, %v458
        %v460 = vlaneseq
        %v461 = vshrl.u32 %v460, 7
        %v462 = vsub.s32 2, %v461
        %v463 = vrot.slane %v252, %v462
        %v464 = vmul.f32 %v431, %v435
        %v465 = vmul.f32 %v430, %v439
        %v466 = vmul.f32 %v429, %v443
        %v467 = vmul.f32 %v428, %v447
        %v468 = vmul.f32 %v427, %v451
        %v469 = vmul.f32 %v426, %v455
        %v470 = vmul.f32 %v425, %v459
        %v471 = vmul.f32 %v424, %v463
        %472 = vrot.lane.b32.xlu0 %v259, 16
        %v473 = vpop.permute.xlu0 %472
        %474 = vrot.lane.b32.xlu0 %v267, 16
        %v475 = vpop.permute.xlu0 %474
        %476 = vrot.lane.b32.xlu0 %v260, 16
        %v477 = vpop.permute.xlu0 %476
        %478 = vrot.lane.b32.xlu0 %v268, 16
        %v479 = vpop.permute.xlu0 %478
        %480 = vrot.lane.b32.xlu0 %v261, 16
        %v481 = vpop.permute.xlu0 %480
        %482 = vrot.lane.b32.xlu0 %v269, 16
        %v483 = vpop.permute.xlu0 %482
        %484 = vrot.lane.b32.xlu0 %v262, 16
        %v485 = vpop.permute.xlu0 %484
        %486 = vrot.lane.b32.xlu0 %v270, 16
        %v487 = vpop.permute.xlu0 %486
        %v488 = vsel %vm423, %v485, %v487
        %v489 = vsel %vm423, %v483, %v485
        %v490 = vsel %vm423, %v481, %v483
        %v491 = vsel %vm423, %v479, %v481
        %v492 = vsel %vm423, %v477, %v479
        %v493 = vsel %vm423, %v475, %v477
        %v494 = vsel %vm423, %v473, %v475
        %v495 = vsel %vm423, %v487, %v473
        %v496 = vmul.f32 %v495, %v435
        %v497 = vmul.f32 %v494, %v439
        %v498 = vmul.f32 %v493, %v443
        %v499 = vmul.f32 %v492, %v447
        %v500 = vmul.f32 %v491, %v451
        %v501 = vmul.f32 %v490, %v455
        %v502 = vmul.f32 %v489, %v459
        %v503 = vmul.f32 %v488, %v463
        %504 = vrot.lane.b32.xlu0 %v399, 16
        %v505 = vpop.permute.xlu0 %504
        %506 = vrot.lane.b32.xlu0 %v400, 16
        %v507 = vpop.permute.xlu0 %506
        %508 = vrot.lane.b32.xlu0 %v401, 16
        %v509 = vpop.permute.xlu0 %508
        %510 = vrot.lane.b32.xlu0 %v402, 16
        %v511 = vpop.permute.xlu0 %510
        %512 = vrot.lane.b32.xlu0 %v403, 16
        %v513 = vpop.permute.xlu0 %512
        %514 = vrot.lane.b32.xlu0 %v404, 16
        %v515 = vpop.permute.xlu0 %514
        %516 = vrot.lane.b32.xlu0 %v405, 16
        %v517 = vpop.permute.xlu0 %516
        %518 = vrot.lane.b32.xlu0 %v406, 16
        %v519 = vpop.permute.xlu0 %518
        %v520 = vsel %vm423, %v517, %v519
        %v521 = vsel %vm423, %v515, %v517
        %v522 = vsel %vm423, %v513, %v515
        %v523 = vsel %vm423, %v511, %v513
        %v524 = vsel %vm423, %v509, %v511
        %v525 = vsel %vm423, %v507, %v509
        %v526 = vsel %vm423, %v505, %v507
        %v527 = vsel %vm423, %v519, %v505
        %v528 = vmul.f32 %v527, %v435
        %v529 = vmul.f32 %v526, %v439
        %v530 = vmul.f32 %v525, %v443
        %v531 = vmul.f32 %v524, %v447
        %v532 = vmul.f32 %v523, %v451
        %v533 = vmul.f32 %v522, %v455
        %v534 = vmul.f32 %v521, %v459
        %v535 = vmul.f32 %v520, %v463
        %536 = vrot.lane.b32.xlu0 %v334, 112
        %v537 = vpop.permute.xlu0 %536
        %538 = vrot.lane.b32.xlu0 %v335, 112
        %v539 = vpop.permute.xlu0 %538
        %540 = vrot.lane.b32.xlu0 %v336, 112
        %v541 = vpop.permute.xlu0 %540
        %542 = vrot.lane.b32.xlu0 %v337, 112
        %v543 = vpop.permute.xlu0 %542
        %544 = vrot.lane.b32.xlu0 %v338, 112
        %v545 = vpop.permute.xlu0 %544
        %546 = vrot.lane.b32.xlu0 %v339, 112
        %v547 = vpop.permute.xlu0 %546
        %548 = vrot.lane.b32.xlu0 %v340, 112
        %v549 = vpop.permute.xlu0 %548
        %550 = vrot.lane.b32.xlu0 %v341, 112
        %v551 = vpop.permute.xlu0 %550
        %vm552 = vcmp.lt.s32.totalorder %v292, 112
        %v553 = vsel %vm552, %v549, %v551
        %v554 = vsel %vm552, %v547, %v549
        %v555 = vsel %vm552, %v545, %v547
        %v556 = vsel %vm552, %v543, %v545
        %v557 = vsel %vm552, %v541, %v543
        %v558 = vsel %vm552, %v539, %v541
        %v559 = vsel %vm552, %v537, %v539
        %v560 = vsel %vm552, %v551, %v537
        %v561 = vlaneseq
        %v562 = vshrl.u32 %v561, 7
        %v563 = vsub.s32 3, %v562
        %v564 = vrot.slane %v245, %v563
        %v565 = vlaneseq
        %v566 = vshrl.u32 %v565, 7
        %v567 = vsub.s32 3, %v566
        %v568 = vrot.slane %v246, %v567
        %v569 = vlaneseq
        %v570 = vshrl.u32 %v569, 7
        %v571 = vsub.s32 3, %v570
        %v572 = vrot.slane %v247, %v571
        %v573 = vlaneseq
        %v574 = vshrl.u32 %v573, 7
        %v575 = vsub.s32 3, %v574
        %v576 = vrot.slane %v248, %v575
        %v577 = vlaneseq
        %v578 = vshrl.u32 %v577, 7
        %v579 = vsub.s32 3, %v578
        %v580 = vrot.slane %v249, %v579
        %v581 = vlaneseq
        %v582 = vshrl.u32 %v581, 7
        %v583 = vsub.s32 3, %v582
        %v584 = vrot.slane %v250, %v583
        %v585 = vlaneseq
        %v586 = vshrl.u32 %v585, 7
        %v587 = vsub.s32 3, %v586
        %v588 = vrot.slane %v251, %v587
        %v589 = vlaneseq
        %v590 = vshrl.u32 %v589, 7
        %v591 = vsub.s32 3, %v590
        %v592 = vrot.slane %v252, %v591
        %v593 = vmul.f32 %v559, %v564
        %v594 = vmul.f32 %v558, %v568
        %v595 = vmul.f32 %v557, %v572
        %v596 = vmul.f32 %v556, %v576
        %v597 = vmul.f32 %v555, %v580
        %v598 = vmul.f32 %v554, %v584
        %v599 = vmul.f32 %v553, %v588
        %v600 = vmul.f32 %v560, %v592
        %601 = vrot.lane.b32.xlu0 %v259, 112
        %v602 = vpop.permute.xlu0 %601
        %603 = vrot.lane.b32.xlu0 %v267, 112
        %v604 = vpop.permute.xlu0 %603
        %605 = vrot.lane.b32.xlu0 %v260, 112
        %v606 = vpop.permute.xlu0 %605
        %607 = vrot.lane.b32.xlu0 %v268, 112
        %v608 = vpop.permute.xlu0 %607
        %609 = vrot.lane.b32.xlu0 %v261, 112
        %v610 = vpop.permute.xlu0 %609
        %611 = vrot.lane.b32.xlu0 %v269, 112
        %v612 = vpop.permute.xlu0 %611
        %613 = vrot.lane.b32.xlu0 %v262, 112
        %v614 = vpop.permute.xlu0 %613
        %615 = vrot.lane.b32.xlu0 %v270, 112
        %v616 = vpop.permute.xlu0 %615
        %v617 = vsel %vm552, %v614, %v616
        %v618 = vsel %vm552, %v612, %v614
        %v619 = vsel %vm552, %v610, %v612
        %v620 = vsel %vm552, %v608, %v610
        %v621 = vsel %vm552, %v606, %v608
        %v622 = vsel %vm552, %v604, %v606
        %v623 = vsel %vm552, %v602, %v604
        %v624 = vsel %vm552, %v616, %v602
        %v625 = vmul.f32 %v623, %v564
        %v626 = vmul.f32 %v622, %v568
        %v627 = vmul.f32 %v621, %v572
        %v628 = vmul.f32 %v620, %v576
        %v629 = vmul.f32 %v619, %v580
        %v630 = vmul.f32 %v618, %v584
        %v631 = vmul.f32 %v617, %v588
        %v632 = vmul.f32 %v624, %v592
        %633 = vrot.lane.b32.xlu0 %v399, 112
        %v634 = vpop.permute.xlu0 %633
        %635 = vrot.lane.b32.xlu0 %v400, 112
        %v636 = vpop.permute.xlu0 %635
        %637 = vrot.lane.b32.xlu0 %v401, 112
        %v638 = vpop.permute.xlu0 %637
        %639 = vrot.lane.b32.xlu0 %v402, 112
        %v640 = vpop.permute.xlu0 %639
        %641 = vrot.lane.b32.xlu0 %v403, 112
        %v642 = vpop.permute.xlu0 %641
        %643 = vrot.lane.b32.xlu0 %v404, 112
        %v644 = vpop.permute.xlu0 %643
        %645 = vrot.lane.b32.xlu0 %v405, 112
        %v646 = vpop.permute.xlu0 %645
        %647 = vrot.lane.b32.xlu0 %v406, 112
        %v648 = vpop.permute.xlu0 %647
        %v649 = vsel %vm552, %v646, %v648
        %v650 = vsel %vm552, %v644, %v646
        %v651 = vsel %vm552, %v642, %v644
        %v652 = vsel %vm552, %v640, %v642
        %v653 = vsel %vm552, %v638, %v640
        %v654 = vsel %vm552, %v636, %v638
        %v655 = vsel %vm552, %v634, %v636
        %v656 = vsel %vm552, %v648, %v634
        %v657 = vmul.f32 %v655, %v564
        %v658 = vmul.f32 %v654, %v568
        %v659 = vmul.f32 %v653, %v572
        %v660 = vmul.f32 %v652, %v576
        %v661 = vmul.f32 %v651, %v580
        %v662 = vmul.f32 %v650, %v584
        %v663 = vmul.f32 %v649, %v588
        %v664 = vmul.f32 %v656, %v592
        %v673 = vrot.slane %v496, 4
        %v674 = vrot.slane %v497, 4
        %v675 = vrot.slane %v498, 4
        %v676 = vrot.slane %v499, 4
        %v677 = vrot.slane %v500, 4
        %v678 = vrot.slane %v501, 4
        %v679 = vrot.slane %v502, 4
        %v680 = vrot.slane %v503, 4
        %v697 = vrot.slane %v334, 4
        %v698 = vrot.slane %v335, 4
        %v699 = vrot.slane %v336, 4
        %v700 = vrot.slane %v337, 4
        %v701 = vrot.slane %v338, 4
        %v702 = vrot.slane %v339, 4
        %v703 = vrot.slane %v340, 4
        %v704 = vrot.slane %v341, 4
        %v721 = vrot.slane %v399, 4
        %v722 = vrot.slane %v400, 4
        %v723 = vrot.slane %v401, 4
        %v724 = vrot.slane %v402, 4
        %v725 = vrot.slane %v403, 4
        %v726 = vrot.slane %v404, 4
        %v727 = vrot.slane %v405, 4
        %v728 = vrot.slane %v406, 4
        %v745 = vrot.slane %v625, 4
        %v746 = vrot.slane %v626, 4
        %v747 = vrot.slane %v627, 4
        %v748 = vrot.slane %v628, 4
        %v749 = vrot.slane %v629, 4
        %v750 = vrot.slane %v630, 4
        %v751 = vrot.slane %v631, 4
        %v752 = vrot.slane %v632, 4
        %vm761 = vcmask 1043456
        %v762 = vsel %vm761, %v464, %v673
        %v763 = vsel %vm761, %v465, %v674
        %v764 = vsel %vm761, %v466, %v675
        %v765 = vsel %vm761, %v467, %v676
        %v766 = vsel %vm761, %v468, %v677
        %v767 = vsel %vm761, %v469, %v678
        %v768 = vsel %vm761, %v470, %v679
        %v769 = vsel %vm761, %v471, %v680
        %v770 = vsel %vm761, %v528, %v697
        %v771 = vsel %vm761, %v529, %v698
        %v772 = vsel %vm761, %v530, %v699
        %v773 = vsel %vm761, %v531, %v700
        %v774 = vsel %vm761, %v532, %v701
        %v775 = vsel %vm761, %v533, %v702
        %v776 = vsel %vm761, %v534, %v703
        %v777 = vsel %vm761, %v535, %v704
        %v778 = vsel %vm761, %v259, %v721
        %v779 = vsel %vm761, %v267, %v722
        %v780 = vsel %vm761, %v260, %v723
        %v781 = vsel %vm761, %v268, %v724
        %v782 = vsel %vm761, %v261, %v725
        %v783 = vsel %vm761, %v269, %v726
        %v784 = vsel %vm761, %v262, %v727
        %v785 = vsel %vm761, %v270, %v728
        %v786 = vsel %vm761, %v593, %v745
        %v787 = vsel %vm761, %v594, %v746
        %v788 = vsel %vm761, %v595, %v747
        %v789 = vsel %vm761, %v596, %v748
        %v790 = vsel %vm761, %v597, %v749
        %v791 = vsel %vm761, %v598, %v750
        %v792 = vsel %vm761, %v599, %v751
        %v793 = vsel %vm761, %v600, %v752
        %v794 = vpack.c.bf16 %v770, %v762
        %v795 = vpack.c.bf16 %v771, %v763
        %v796 = vpack.c.bf16 %v772, %v764
        %v797 = vpack.c.bf16 %v773, %v765
        %v798 = vpack.c.bf16 %v774, %v766
        %v799 = vpack.c.bf16 %v775, %v767
        %v800 = vpack.c.bf16 %v776, %v768
        %v801 = vpack.c.bf16 %v777, %v769
        %v802 = vpack.c.bf16 %v786, %v778
        %v803 = vpack.c.bf16 %v787, %v779
        %v804 = vpack.c.bf16 %v788, %v780
        %v805 = vpack.c.bf16 %v789, %v781
        %v806 = vpack.c.bf16 %v790, %v782
        %v807 = vpack.c.bf16 %v791, %v783
        %v808 = vpack.c.bf16 %v792, %v784
        %v809 = vpack.c.bf16 %v793, %v785
        %v810 = vpack.c.bf16 %v657, %v657
        %v811 = vpack.c.bf16 %v658, %v658
        %v812 = vpack.c.bf16 %v659, %v659
        %v813 = vpack.c.bf16 %v660, %v660
        %v814 = vpack.c.bf16 %v661, %v661
        %v815 = vpack.c.bf16 %v662, %v662
        %v816 = vpack.c.bf16 %v663, %v663
        %v817 = vpack.c.bf16 %v664, %v664
        %vm818 = vcmask 293888
        %v820 = vsel %vm818, %v254, 0
        %vm822 = vcmask 1041408
        %v824 = vsel %vm822, %v810, 0
        %v827 = vsel %vm822, %v811, 0
        %v830 = vsel %vm822, %v812, 0
        %v833 = vsel %vm822, %v813, 0
        %v836 = vsel %vm822, %v814, 0
        %v839 = vsel %vm822, %v815, 0
        %v842 = vsel %vm822, %v816, 0
        %v845 = vsel %vm822, %v817, 0
        %847 = vmatprep.subr.bf16.mxu0 0
        %848 = vmatpush1.bf16.msra.mxu0 0
        %849 = vmatprep.subr.bf16.mxu0 0
        %850 = vmatpush1.bf16.msra.mxu0 0
        %851 = vmatprep.subr.bf16.mxu0 0
        %852 = vmatpush1.bf16.msra.mxu0 0
        %853 = vmatprep.subr.bf16.mxu0 0
        %854 = vmatpush1.bf16.msra.mxu0 0
        %855 = vmatprep.subr.bf16.mxu0 0
        %856 = vmatpush1.bf16.msra.mxu0 0
        %857 = vmatprep.subr.bf16.mxu0 %v827
        %858 = vmatpush1.bf16.msra.mxu0 %v824
        %859 = vmatprep.subr.bf16.mxu0 %v803
        %860 = vmatpush1.bf16.msra.mxu0 %v802
        %861 = vmatprep.subr.bf16.mxu0 %v795
        %862 = vmatpush1.bf16.msra.mxu0 %v794
        %863 = vmatprep.subr.bf16.mxu0 0
        %864 = vmatpush2.bf16.msra.mxu0 0
        %865 = vmatprep.subr.bf16.mxu0 0
        %866 = vmatpush2.bf16.msra.mxu0 0
        %867 = vmatprep.subr.bf16.mxu0 0
        %868 = vmatpush2.bf16.msra.mxu0 0
        %869 = vmatprep.subr.bf16.mxu0 0
        %870 = vmatpush2.bf16.msra.mxu0 0
        %871 = vmatprep.subr.bf16.mxu0 0
        %872 = vmatpush2.bf16.msra.mxu0 0
        %873 = vmatprep.subr.bf16.mxu0 0
        %874 = vmatpush2.bf16.msra.mxu0 0
        %875 = vmatprep.subr.bf16.mxu0 0
        %876 = vmatpush2.bf16.msra.mxu0 0
        %877 = vmatprep.subr.bf16.mxu0 0
        %878 = vmatpush2.bf16.msra.mxu0 0
        %879 = vmatprep.mubr.bf16.mxu0 0
        %880 = vmatmul.mubr.bf16.gmra.mxu0 %v820
        %v881 = vpop.f32.mrf.mxu0
        %v882 = vadd.f32 0.0, %v881
        %v883 = vpop.f32.mrf.mxu0
        %v884 = vadd.f32 0.0, %v883
        %v885 = vpop.f32.mrf.mxu0
        %v886 = vpop.f32.mrf.mxu0
        %887 = vdwg.mxu0
        %888 = vmatprep.subr.bf16.mxu0 0
        %889 = vmatpush1.bf16.msra.mxu0 0
        %890 = vmatprep.subr.bf16.mxu0 0
        %891 = vmatpush1.bf16.msra.mxu0 0
        %892 = vmatprep.subr.bf16.mxu0 0
        %893 = vmatpush1.bf16.msra.mxu0 0
        %894 = vmatprep.subr.bf16.mxu0 0
        %895 = vmatpush1.bf16.msra.mxu0 0
        %896 = vmatprep.subr.bf16.mxu0 0
        %897 = vmatpush1.bf16.msra.mxu0 0
        %898 = vmatprep.subr.bf16.mxu0 %v833
        %899 = vmatpush1.bf16.msra.mxu0 %v830
        %900 = vmatprep.subr.bf16.mxu0 %v805
        %901 = vmatpush1.bf16.msra.mxu0 %v804
        %902 = vmatprep.subr.bf16.mxu0 %v797
        %903 = vmatpush1.bf16.msra.mxu0 %v796
        %904 = vmatprep.subr.bf16.mxu0 0
        %905 = vmatpush2.bf16.msra.mxu0 0
        %906 = vmatprep.subr.bf16.mxu0 0
        %907 = vmatpush2.bf16.msra.mxu0 0
        %908 = vmatprep.subr.bf16.mxu0 0
        %909 = vmatpush2.bf16.msra.mxu0 0
        %910 = vmatprep.subr.bf16.mxu0 0
        %911 = vmatpush2.bf16.msra.mxu0 0
        %912 = vmatprep.subr.bf16.mxu0 0
        %913 = vmatpush2.bf16.msra.mxu0 0
        %914 = vmatprep.subr.bf16.mxu0 0
        %915 = vmatpush2.bf16.msra.mxu0 0
        %916 = vmatprep.subr.bf16.mxu0 0
        %917 = vmatpush2.bf16.msra.mxu0 0
        %918 = vmatprep.subr.bf16.mxu0 0
        %919 = vmatpush2.bf16.msra.mxu0 0
        %920 = vmatprep.mubr.bf16.mxu0 0
        %921 = vmatmul.mubr.bf16.gmra.mxu0 %v820
        %v922 = vpop.f32.mrf.mxu0
        %v923 = vadd.f32 0.0, %v922
        %v924 = vpop.f32.mrf.mxu0
        %v925 = vadd.f32 0.0, %v924
        %v926 = vpop.f32.mrf.mxu0
        %v927 = vpop.f32.mrf.mxu0
        %928 = vdwg.mxu0
        %929 = vmatprep.subr.bf16.mxu0 0
        %930 = vmatpush1.bf16.msra.mxu0 0
        %931 = vmatprep.subr.bf16.mxu0 0
        %932 = vmatpush1.bf16.msra.mxu0 0
        %933 = vmatprep.subr.bf16.mxu0 0
        %934 = vmatpush1.bf16.msra.mxu0 0
        %935 = vmatprep.subr.bf16.mxu0 0
        %936 = vmatpush1.bf16.msra.mxu0 0
        %937 = vmatprep.subr.bf16.mxu0 0
        %938 = vmatpush1.bf16.msra.mxu0 0
        %939 = vmatprep.subr.bf16.mxu0 %v839
        %940 = vmatpush1.bf16.msra.mxu0 %v836
        %941 = vmatprep.subr.bf16.mxu0 %v807
        %942 = vmatpush1.bf16.msra.mxu0 %v806
        %943 = vmatprep.subr.bf16.mxu0 %v799
        %944 = vmatpush1.bf16.msra.mxu0 %v798
        %945 = vmatprep.subr.bf16.mxu0 0
        %946 = vmatpush2.bf16.msra.mxu0 0
        %947 = vmatprep.subr.bf16.mxu0 0
        %948 = vmatpush2.bf16.msra.mxu0 0
        %949 = vmatprep.subr.bf16.mxu0 0
        %950 = vmatpush2.bf16.msra.mxu0 0
        %951 = vmatprep.subr.bf16.mxu0 0
        %952 = vmatpush2.bf16.msra.mxu0 0
        %953 = vmatprep.subr.bf16.mxu0 0
        %954 = vmatpush2.bf16.msra.mxu0 0
        %955 = vmatprep.subr.bf16.mxu0 0
        %956 = vmatpush2.bf16.msra.mxu0 0
        %957 = vmatprep.subr.bf16.mxu0 0
        %958 = vmatpush2.bf16.msra.mxu0 0
        %959 = vmatprep.subr.bf16.mxu0 0
        %960 = vmatpush2.bf16.msra.mxu0 0
        %961 = vmatprep.mubr.bf16.mxu0 0
        %962 = vmatmul.mubr.bf16.gmra.mxu0 %v820
        %v963 = vpop.f32.mrf.mxu0
        %v964 = vadd.f32 0.0, %v963
        %v965 = vpop.f32.mrf.mxu0
        %v966 = vadd.f32 0.0, %v965
        %v967 = vpop.f32.mrf.mxu0
        %v968 = vpop.f32.mrf.mxu0
        %969 = vdwg.mxu0
        %970 = vmatprep.subr.bf16.mxu0 0
        %971 = vmatpush1.bf16.msra.mxu0 0
        %972 = vmatprep.subr.bf16.mxu0 0
        %973 = vmatpush1.bf16.msra.mxu0 0
        %974 = vmatprep.subr.bf16.mxu0 0
        %975 = vmatpush1.bf16.msra.mxu0 0
        %976 = vmatprep.subr.bf16.mxu0 0
        %977 = vmatpush1.bf16.msra.mxu0 0
        %978 = vmatprep.subr.bf16.mxu0 0
        %979 = vmatpush1.bf16.msra.mxu0 0
        %980 = vmatprep.subr.bf16.mxu0 %v845
        %981 = vmatpush1.bf16.msra.mxu0 %v842
        %982 = vmatprep.subr.bf16.mxu0 %v809
        %983 = vmatpush1.bf16.msra.mxu0 %v808
        %984 = vmatprep.subr.bf16.mxu0 %v801
        %985 = vmatpush1.bf16.msra.mxu0 %v800
        %986 = vmatprep.subr.bf16.mxu0 0
        %987 = vmatpush2.bf16.msra.mxu0 0
        %988 = vmatprep.subr.bf16.mxu0 0
        %989 = vmatpush2.bf16.msra.mxu0 0
        %990 = vmatprep.subr.bf16.mxu0 0
        %991 = vmatpush2.bf16.msra.mxu0 0
        %992 = vmatprep.subr.bf16.mxu0 0
        %993 = vmatpush2.bf16.msra.mxu0 0
        %994 = vmatprep.subr.bf16.mxu0 0
        %995 = vmatpush2.bf16.msra.mxu0 0
        %996 = vmatprep.subr.bf16.mxu0 0
        %997 = vmatpush2.bf16.msra.mxu0 0
        %998 = vmatprep.subr.bf16.mxu0 0
        %999 = vmatpush2.bf16.msra.mxu0 0
        %1000 = vmatprep.subr.bf16.mxu0 0
        %1001 = vmatpush2.bf16.msra.mxu0 0
        %1002 = vmatprep.mubr.bf16.mxu0 0
        %1003 = vmatmul.mubr.bf16.gmra.mxu0 %v820
        %v1004 = vpop.f32.mrf.mxu0
        %v1005 = vadd.f32 0.0, %v1004
        %v1006 = vpop.f32.mrf.mxu0
        %v1007 = vadd.f32 0.0, %v1006
        %v1008 = vpop.f32.mrf.mxu0
        %v1009 = vpop.f32.mrf.mxu0
        %1010 = vdwg.mxu0
        %v1012 = vsel %vm818, %v258, 0
        %1014 = vmatprep.subr.bf16.mxu0 0
        %1015 = vmatpush1.bf16.msra.mxu0 0
        %1016 = vmatprep.subr.bf16.mxu0 0
        %1017 = vmatpush1.bf16.msra.mxu0 0
        %1018 = vmatprep.subr.bf16.mxu0 0
        %1019 = vmatpush1.bf16.msra.mxu0 0
        %1020 = vmatprep.subr.bf16.mxu0 0
        %1021 = vmatpush1.bf16.msra.mxu0 0
        %1022 = vmatprep.subr.bf16.mxu0 0
        %1023 = vmatpush1.bf16.msra.mxu0 0
        %1024 = vmatprep.subr.bf16.mxu0 %v827
        %1025 = vmatpush1.bf16.msra.mxu0 %v824
        %1026 = vmatprep.subr.bf16.mxu0 %v803
        %1027 = vmatpush1.bf16.msra.mxu0 %v802
        %1028 = vmatprep.subr.bf16.mxu0 %v795
        %1029 = vmatpush1.bf16.msra.mxu0 %v794
        %1030 = vmatprep.subr.bf16.mxu0 0
        %1031 = vmatpush2.bf16.msra.mxu0 0
        %1032 = vmatprep.subr.bf16.mxu0 0
        %1033 = vmatpush2.bf16.msra.mxu0 0
        %1034 = vmatprep.subr.bf16.mxu0 0
        %1035 = vmatpush2.bf16.msra.mxu0 0
        %1036 = vmatprep.subr.bf16.mxu0 0
        %1037 = vmatpush2.bf16.msra.mxu0 0
        %1038 = vmatprep.subr.bf16.mxu0 0
        %1039 = vmatpush2.bf16.msra.mxu0 0
        %1040 = vmatprep.subr.bf16.mxu0 0
        %1041 = vmatpush2.bf16.msra.mxu0 0
        %1042 = vmatprep.subr.bf16.mxu0 0
        %1043 = vmatpush2.bf16.msra.mxu0 0
        %1044 = vmatprep.subr.bf16.mxu0 0
        %1045 = vmatpush2.bf16.msra.mxu0 0
        %1046 = vmatprep.mubr.bf16.mxu0 0
        %1047 = vmatmul.mubr.bf16.gmra.mxu0 %v1012
        %v1048 = vpop.f32.mrf.mxu0
        %v1049 = vadd.f32 0.0, %v1048
        %v1050 = vpop.f32.mrf.mxu0
        %v1051 = vadd.f32 0.0, %v1050
        %v1052 = vpop.f32.mrf.mxu0
        %v1053 = vpop.f32.mrf.mxu0
        %1054 = vdwg.mxu0
        %1055 = vmatprep.subr.bf16.mxu0 0
        %1056 = vmatpush1.bf16.msra.mxu0 0
        %1057 = vmatprep.subr.bf16.mxu0 0
        %1058 = vmatpush1.bf16.msra.mxu0 0
        %1059 = vmatprep.subr.bf16.mxu0 0
        %1060 = vmatpush1.bf16.msra.mxu0 0
        %1061 = vmatprep.subr.bf16.mxu0 0
        %1062 = vmatpush1.bf16.msra.mxu0 0
        %1063 = vmatprep.subr.bf16.mxu0 0
        %1064 = vmatpush1.bf16.msra.mxu0 0
        %1065 = vmatprep.subr.bf16.mxu0 %v833
        %1066 = vmatpush1.bf16.msra.mxu0 %v830
        %1067 = vmatprep.subr.bf16.mxu0 %v805
        %1068 = vmatpush1.bf16.msra.mxu0 %v804
        %1069 = vmatprep.subr.bf16.mxu0 %v797
        %1070 = vmatpush1.bf16.msra.mxu0 %v796
        %1071 = vmatprep.subr.bf16.mxu0 0
        %1072 = vmatpush2.bf16.msra.mxu0 0
        %1073 = vmatprep.subr.bf16.mxu0 0
        %1074 = vmatpush2.bf16.msra.mxu0 0
        %1075 = vmatprep.subr.bf16.mxu0 0
        %1076 = vmatpush2.bf16.msra.mxu0 0
        %1077 = vmatprep.subr.bf16.mxu0 0
        %1078 = vmatpush2.bf16.msra.mxu0 0
        %1079 = vmatprep.subr.bf16.mxu0 0
        %1080 = vmatpush2.bf16.msra.mxu0 0
        %1081 = vmatprep.subr.bf16.mxu0 0
        %1082 = vmatpush2.bf16.msra.mxu0 0
        %1083 = vmatprep.subr.bf16.mxu0 0
        %1084 = vmatpush2.bf16.msra.mxu0 0
        %1085 = vmatprep.subr.bf16.mxu0 0
        %1086 = vmatpush2.bf16.msra.mxu0 0
        %1087 = vmatprep.mubr.bf16.mxu0 0
        %1088 = vmatmul.mubr.bf16.gmra.mxu0 %v1012
        %v1089 = vpop.f32.mrf.mxu0
        %v1090 = vadd.f32 0.0, %v1089
        %v1091 = vpop.f32.mrf.mxu0
        %v1092 = vadd.f32 0.0, %v1091
        %v1093 = vpop.f32.mrf.mxu0
        %v1094 = vpop.f32.mrf.mxu0
        %1095 = vdwg.mxu0
        %1096 = vmatprep.subr.bf16.mxu0 0
        %1097 = vmatpush1.bf16.msra.mxu0 0
        %1098 = vmatprep.subr.bf16.mxu0 0
        %1099 = vmatpush1.bf16.msra.mxu0 0
        %1100 = vmatprep.subr.bf16.mxu0 0
        %1101 = vmatpush1.bf16.msra.mxu0 0
        %1102 = vmatprep.subr.bf16.mxu0 0
        %1103 = vmatpush1.bf16.msra.mxu0 0
        %1104 = vmatprep.subr.bf16.mxu0 0
        %1105 = vmatpush1.bf16.msra.mxu0 0
        %1106 = vmatprep.subr.bf16.mxu0 %v839
        %1107 = vmatpush1.bf16.msra.mxu0 %v836
        %1108 = vmatprep.subr.bf16.mxu0 %v807
        %1109 = vmatpush1.bf16.msra.mxu0 %v806
        %1110 = vmatprep.subr.bf16.mxu0 %v799
        %1111 = vmatpush1.bf16.msra.mxu0 %v798
        %1112 = vmatprep.subr.bf16.mxu0 0
        %1113 = vmatpush2.bf16.msra.mxu0 0
        %1114 = vmatprep.subr.bf16.mxu0 0
        %1115 = vmatpush2.bf16.msra.mxu0 0
        %1116 = vmatprep.subr.bf16.mxu0 0
        %1117 = vmatpush2.bf16.msra.mxu0 0
        %1118 = vmatprep.subr.bf16.mxu0 0
        %1119 = vmatpush2.bf16.msra.mxu0 0
        %1120 = vmatprep.subr.bf16.mxu0 0
        %1121 = vmatpush2.bf16.msra.mxu0 0
        %1122 = vmatprep.subr.bf16.mxu0 0
        %1123 = vmatpush2.bf16.msra.mxu0 0
        %1124 = vmatprep.subr.bf16.mxu0 0
        %1125 = vmatpush2.bf16.msra.mxu0 0
        %1126 = vmatprep.subr.bf16.mxu0 0
        %1127 = vmatpush2.bf16.msra.mxu0 0
        %1128 = vmatprep.mubr.bf16.mxu0 0
        %1129 = vmatmul.mubr.bf16.gmra.mxu0 %v1012
        %v1130 = vpop.f32.mrf.mxu0
        %v1131 = vadd.f32 0.0, %v1130
        %v1132 = vpop.f32.mrf.mxu0
        %v1133 = vadd.f32 0.0, %v1132
        %v1134 = vpop.f32.mrf.mxu0
        %v1135 = vpop.f32.mrf.mxu0
        %1136 = vdwg.mxu0
        %1137 = vmatprep.subr.bf16.mxu0 0
        %1138 = vmatpush1.bf16.msra.mxu0 0
        %1139 = vmatprep.subr.bf16.mxu0 0
        %1140 = vmatpush1.bf16.msra.mxu0 0
        %1141 = vmatprep.subr.bf16.mxu0 0
        %1142 = vmatpush1.bf16.msra.mxu0 0
        %1143 = vmatprep.subr.bf16.mxu0 0
        %1144 = vmatpush1.bf16.msra.mxu0 0
        %1145 = vmatprep.subr.bf16.mxu0 0
        %1146 = vmatpush1.bf16.msra.mxu0 0
        %1147 = vmatprep.subr.bf16.mxu0 %v845
        %1148 = vmatpush1.bf16.msra.mxu0 %v842
        %1149 = vmatprep.subr.bf16.mxu0 %v809
        %1150 = vmatpush1.bf16.msra.mxu0 %v808
        %1151 = vmatprep.subr.bf16.mxu0 %v801
        %1152 = vmatpush1.bf16.msra.mxu0 %v800
        %1153 = vmatprep.subr.bf16.mxu0 0
        %1154 = vmatpush2.bf16.msra.mxu0 0
        %1155 = vmatprep.subr.bf16.mxu0 0
        %1156 = vmatpush2.bf16.msra.mxu0 0
        %1157 = vmatprep.subr.bf16.mxu0 0
        %1158 = vmatpush2.bf16.msra.mxu0 0
        %1159 = vmatprep.subr.bf16.mxu0 0
        %1160 = vmatpush2.bf16.msra.mxu0 0
        %1161 = vmatprep.subr.bf16.mxu0 0
        %1162 = vmatpush2.bf16.msra.mxu0 0
        %1163 = vmatprep.subr.bf16.mxu0 0
        %1164 = vmatpush2.bf16.msra.mxu0 0
        %1165 = vmatprep.subr.bf16.mxu0 0
        %1166 = vmatpush2.bf16.msra.mxu0 0
        %1167 = vmatprep.subr.bf16.mxu0 0
        %1168 = vmatpush2.bf16.msra.mxu0 0
        %1169 = vmatprep.mubr.bf16.mxu0 0
        %1170 = vmatmul.mubr.bf16.gmra.mxu0 %v1012
        %v1171 = vpop.f32.mrf.mxu0
        %v1172 = vadd.f32 0.0, %v1171
        %v1173 = vpop.f32.mrf.mxu0
        %v1174 = vadd.f32 0.0, %v1173
        %v1175 = vpop.f32.mrf.mxu0
        %v1176 = vpop.f32.mrf.mxu0
        %1177 = vdwg.mxu0
        %v1178 = vlaneseq
        %v1179 = vshrl.u32 %v1178, 7
        %v1180 = vsub.s32 4, %v1179
        %v1181 = vrot.slane %v245, %v1180
        %v1182 = vlaneseq
        %v1183 = vshrl.u32 %v1182, 7
        %v1184 = vsub.s32 4, %v1183
        %v1185 = vrot.slane %v246, %v1184
        %v1186 = vlaneseq
        %v1187 = vshrl.u32 %v1186, 7
        %v1188 = vsub.s32 4, %v1187
        %v1189 = vrot.slane %v247, %v1188
        %v1190 = vlaneseq
        %v1191 = vshrl.u32 %v1190, 7
        %v1192 = vsub.s32 4, %v1191
        %v1193 = vrot.slane %v248, %v1192
        %v1194 = vlaneseq
        %v1195 = vshrl.u32 %v1194, 7
        %v1196 = vsub.s32 4, %v1195
        %v1197 = vrot.slane %v249, %v1196
        %v1198 = vlaneseq
        %v1199 = vshrl.u32 %v1198, 7
        %v1200 = vsub.s32 4, %v1199
        %v1201 = vrot.slane %v250, %v1200
        %v1202 = vlaneseq
        %v1203 = vshrl.u32 %v1202, 7
        %v1204 = vsub.s32 4, %v1203
        %v1205 = vrot.slane %v251, %v1204
        %v1206 = vlaneseq
        %v1207 = vshrl.u32 %v1206, 7
        %v1208 = vsub.s32 4, %v1207
        %v1209 = vrot.slane %v252, %v1208
        %v1210 = vmul.f32 %v1181, %v1007
        %v1211 = vmul.f32 %v1185, %v882
        %v1212 = vmul.f32 %v1189, %v884
        %v1213 = vmul.f32 %v1193, %v923
        %v1214 = vmul.f32 %v1197, %v925
        %v1215 = vmul.f32 %v1201, %v964
        %v1216 = vmul.f32 %v1205, %v966
        %v1217 = vmul.f32 %v1209, %v1005
        %v1219 = vsel %vm818, %v256, 0
        %1221 = vmatprep.subr.bf16.mxu0 0
        %1222 = vmatpush1.bf16.msra.mxu0 0
        %1223 = vmatprep.subr.bf16.mxu0 0
        %1224 = vmatpush1.bf16.msra.mxu0 0
        %1225 = vmatprep.subr.bf16.mxu0 0
        %1226 = vmatpush1.bf16.msra.mxu0 0
        %1227 = vmatprep.subr.bf16.mxu0 0
        %1228 = vmatpush1.bf16.msra.mxu0 0
        %1229 = vmatprep.subr.bf16.mxu0 0
        %1230 = vmatpush1.bf16.msra.mxu0 0
        %1231 = vmatprep.subr.bf16.mxu0 %v827
        %1232 = vmatpush1.bf16.msra.mxu0 %v824
        %1233 = vmatprep.subr.bf16.mxu0 %v803
        %1234 = vmatpush1.bf16.msra.mxu0 %v802
        %1235 = vmatprep.subr.bf16.mxu0 %v795
        %1236 = vmatpush1.bf16.msra.mxu0 %v794
        %1237 = vmatprep.subr.bf16.mxu0 0
        %1238 = vmatpush2.bf16.msra.mxu0 0
        %1239 = vmatprep.subr.bf16.mxu0 0
        %1240 = vmatpush2.bf16.msra.mxu0 0
        %1241 = vmatprep.subr.bf16.mxu0 0
        %1242 = vmatpush2.bf16.msra.mxu0 0
        %1243 = vmatprep.subr.bf16.mxu0 0
        %1244 = vmatpush2.bf16.msra.mxu0 0
        %1245 = vmatprep.subr.bf16.mxu0 0
        %1246 = vmatpush2.bf16.msra.mxu0 0
        %1247 = vmatprep.subr.bf16.mxu0 0
        %1248 = vmatpush2.bf16.msra.mxu0 0
        %1249 = vmatprep.subr.bf16.mxu0 0
        %1250 = vmatpush2.bf16.msra.mxu0 0
        %1251 = vmatprep.subr.bf16.mxu0 0
        %1252 = vmatpush2.bf16.msra.mxu0 0
        %1253 = vmatprep.mubr.bf16.mxu0 0
        %1254 = vmatmul.mubr.bf16.gmra.mxu0 %v1219
        %v1255 = vpop.f32.mrf.mxu0
        %v1256 = vadd.f32 %v1210, %v1255
        %v1257 = vpop.f32.mrf.mxu0
        %v1258 = vadd.f32 %v1211, %v1257
        %v1259 = vpop.f32.mrf.mxu0
        %v1260 = vpop.f32.mrf.mxu0
        %1261 = vdwg.mxu0
        %1262 = vmatprep.subr.bf16.mxu0 0
        %1263 = vmatpush1.bf16.msra.mxu0 0
        %1264 = vmatprep.subr.bf16.mxu0 0
        %1265 = vmatpush1.bf16.msra.mxu0 0
        %1266 = vmatprep.subr.bf16.mxu0 0
        %1267 = vmatpush1.bf16.msra.mxu0 0
        %1268 = vmatprep.subr.bf16.mxu0 0
        %1269 = vmatpush1.bf16.msra.mxu0 0
        %1270 = vmatprep.subr.bf16.mxu0 0
        %1271 = vmatpush1.bf16.msra.mxu0 0
        %1272 = vmatprep.subr.bf16.mxu0 %v833
        %1273 = vmatpush1.bf16.msra.mxu0 %v830
        %1274 = vmatprep.subr.bf16.mxu0 %v805
        %1275 = vmatpush1.bf16.msra.mxu0 %v804
        %1276 = vmatprep.subr.bf16.mxu0 %v797
        %1277 = vmatpush1.bf16.msra.mxu0 %v796
        %1278 = vmatprep.subr.bf16.mxu0 0
        %1279 = vmatpush2.bf16.msra.mxu0 0
        %1280 = vmatprep.subr.bf16.mxu0 0
        %1281 = vmatpush2.bf16.msra.mxu0 0
        %1282 = vmatprep.subr.bf16.mxu0 0
        %1283 = vmatpush2.bf16.msra.mxu0 0
        %1284 = vmatprep.subr.bf16.mxu0 0
        %1285 = vmatpush2.bf16.msra.mxu0 0
        %1286 = vmatprep.subr.bf16.mxu0 0
        %1287 = vmatpush2.bf16.msra.mxu0 0
        %1288 = vmatprep.subr.bf16.mxu0 0
        %1289 = vmatpush2.bf16.msra.mxu0 0
        %1290 = vmatprep.subr.bf16.mxu0 0
        %1291 = vmatpush2.bf16.msra.mxu0 0
        %1292 = vmatprep.subr.bf16.mxu0 0
        %1293 = vmatpush2.bf16.msra.mxu0 0
        %1294 = vmatprep.mubr.bf16.mxu0 0
        %1295 = vmatmul.mubr.bf16.gmra.mxu0 %v1219
        %v1296 = vpop.f32.mrf.mxu0
        %v1297 = vadd.f32 %v1212, %v1296
        %v1298 = vpop.f32.mrf.mxu0
        %v1299 = vadd.f32 %v1213, %v1298
        %v1300 = vpop.f32.mrf.mxu0
        %v1301 = vpop.f32.mrf.mxu0
        %1302 = vdwg.mxu0
        %1303 = vmatprep.subr.bf16.mxu0 0
        %1304 = vmatpush1.bf16.msra.mxu0 0
        %1305 = vmatprep.subr.bf16.mxu0 0
        %1306 = vmatpush1.bf16.msra.mxu0 0
        %1307 = vmatprep.subr.bf16.mxu0 0
        %1308 = vmatpush1.bf16.msra.mxu0 0
        %1309 = vmatprep.subr.bf16.mxu0 0
        %1310 = vmatpush1.bf16.msra.mxu0 0
        %1311 = vmatprep.subr.bf16.mxu0 0
        %1312 = vmatpush1.bf16.msra.mxu0 0
        %1313 = vmatprep.subr.bf16.mxu0 %v839
        %1314 = vmatpush1.bf16.msra.mxu0 %v836
        %1315 = vmatprep.subr.bf16.mxu0 %v807
        %1316 = vmatpush1.bf16.msra.mxu0 %v806
        %1317 = vmatprep.subr.bf16.mxu0 %v799
        %1318 = vmatpush1.bf16.msra.mxu0 %v798
        %1319 = vmatprep.subr.bf16.mxu0 0
        %1320 = vmatpush2.bf16.msra.mxu0 0
        %1321 = vmatprep.subr.bf16.mxu0 0
        %1322 = vmatpush2.bf16.msra.mxu0 0
        %1323 = vmatprep.subr.bf16.mxu0 0
        %1324 = vmatpush2.bf16.msra.mxu0 0
        %1325 = vmatprep.subr.bf16.mxu0 0
        %1326 = vmatpush2.bf16.msra.mxu0 0
        %1327 = vmatprep.subr.bf16.mxu0 0
        %1328 = vmatpush2.bf16.msra.mxu0 0
        %1329 = vmatprep.subr.bf16.mxu0 0
        %1330 = vmatpush2.bf16.msra.mxu0 0
        %1331 = vmatprep.subr.bf16.mxu0 0
        %1332 = vmatpush2.bf16.msra.mxu0 0
        %1333 = vmatprep.subr.bf16.mxu0 0
        %1334 = vmatpush2.bf16.msra.mxu0 0
        %1335 = vmatprep.mubr.bf16.mxu0 0
        %1336 = vmatmul.mubr.bf16.gmra.mxu0 %v1219
        %v1337 = vpop.f32.mrf.mxu0
        %v1338 = vadd.f32 %v1214, %v1337
        %v1339 = vpop.f32.mrf.mxu0
        %v1340 = vadd.f32 %v1215, %v1339
        %v1341 = vpop.f32.mrf.mxu0
        %v1342 = vpop.f32.mrf.mxu0
        %1343 = vdwg.mxu0
        %1344 = vmatprep.subr.bf16.mxu0 0
        %1345 = vmatpush1.bf16.msra.mxu0 0
        %1346 = vmatprep.subr.bf16.mxu0 0
        %1347 = vmatpush1.bf16.msra.mxu0 0
        %1348 = vmatprep.subr.bf16.mxu0 0
        %1349 = vmatpush1.bf16.msra.mxu0 0
        %1350 = vmatprep.subr.bf16.mxu0 0
        %1351 = vmatpush1.bf16.msra.mxu0 0
        %1352 = vmatprep.subr.bf16.mxu0 0
        %1353 = vmatpush1.bf16.msra.mxu0 0
        %1354 = vmatprep.subr.bf16.mxu0 %v845
        %1355 = vmatpush1.bf16.msra.mxu0 %v842
        %1356 = vmatprep.subr.bf16.mxu0 %v809
        %1357 = vmatpush1.bf16.msra.mxu0 %v808
        %1358 = vmatprep.subr.bf16.mxu0 %v801
        %1359 = vmatpush1.bf16.msra.mxu0 %v800
        %1360 = vmatprep.subr.bf16.mxu0 0
        %1361 = vmatpush2.bf16.msra.mxu0 0
        %1362 = vmatprep.subr.bf16.mxu0 0
        %1363 = vmatpush2.bf16.msra.mxu0 0
        %1364 = vmatprep.subr.bf16.mxu0 0
        %1365 = vmatpush2.bf16.msra.mxu0 0
        %1366 = vmatprep.subr.bf16.mxu0 0
        %1367 = vmatpush2.bf16.msra.mxu0 0
        %1368 = vmatprep.subr.bf16.mxu0 0
        %1369 = vmatpush2.bf16.msra.mxu0 0
        %1370 = vmatprep.subr.bf16.mxu0 0
        %1371 = vmatpush2.bf16.msra.mxu0 0
        %1372 = vmatprep.subr.bf16.mxu0 0
        %1373 = vmatpush2.bf16.msra.mxu0 0
        %1374 = vmatprep.subr.bf16.mxu0 0
        %1375 = vmatpush2.bf16.msra.mxu0 0
        %1376 = vmatprep.mubr.bf16.mxu0 0
        %1377 = vmatmul.mubr.bf16.gmra.mxu0 %v1219
        %v1378 = vpop.f32.mrf.mxu0
        %v1379 = vadd.f32 %v1216, %v1378
        %v1380 = vpop.f32.mrf.mxu0
        %v1381 = vadd.f32 %v1217, %v1380
        %v1382 = vpop.f32.mrf.mxu0
        %v1383 = vpop.f32.mrf.mxu0
        %1384 = vdwg.mxu0
        %v1385 = vlaneseq
        %v1386 = vshrl.u32 %v1385, 7
        %v1387 = vsub.s32 5, %v1386
        %v1388 = vrot.slane %v245, %v1387
        %v1389 = vlaneseq
        %v1390 = vshrl.u32 %v1389, 7
        %v1391 = vsub.s32 5, %v1390
        %v1392 = vrot.slane %v246, %v1391
        %v1393 = vlaneseq
        %v1394 = vshrl.u32 %v1393, 7
        %v1395 = vsub.s32 5, %v1394
        %v1396 = vrot.slane %v247, %v1395
        %v1397 = vlaneseq
        %v1398 = vshrl.u32 %v1397, 7
        %v1399 = vsub.s32 5, %v1398
        %v1400 = vrot.slane %v248, %v1399
        %v1401 = vlaneseq
        %v1402 = vshrl.u32 %v1401, 7
        %v1403 = vsub.s32 5, %v1402
        %v1404 = vrot.slane %v249, %v1403
        %v1405 = vlaneseq
        %v1406 = vshrl.u32 %v1405, 7
        %v1407 = vsub.s32 5, %v1406
        %v1408 = vrot.slane %v250, %v1407
        %v1409 = vlaneseq
        %v1410 = vshrl.u32 %v1409, 7
        %v1411 = vsub.s32 5, %v1410
        %v1412 = vrot.slane %v251, %v1411
        %v1413 = vlaneseq
        %v1414 = vshrl.u32 %v1413, 7
        %v1415 = vsub.s32 5, %v1414
        %v1416 = vrot.slane %v252, %v1415
        %v1417 = vmul.f32 %v1388, %v1051
        %v1418 = vmul.f32 %v1392, %v1090
        %v1419 = vmul.f32 %v1396, %v1092
        %v1420 = vmul.f32 %v1400, %v1131
        %v1421 = vmul.f32 %v1404, %v1133
        %v1422 = vmul.f32 %v1408, %v1172
        %v1423 = vmul.f32 %v1412, %v1174
        %v1424 = vmul.f32 %v1416, %v1049
        %v1425 = vadd.f32 %v1256, %v1417
        %v1426 = vadd.f32 %v1258, %v1418
        %v1427 = vadd.f32 %v1297, %v1419
        %v1428 = vadd.f32 %v1299, %v1420
        %v1429 = vadd.f32 %v1338, %v1421
        %v1430 = vadd.f32 %v1340, %v1422
        %v1431 = vadd.f32 %v1379, %v1423
        %v1432 = vadd.f32 %v1381, %v1424
        %1434 = vset.pattern.permute.xlu0 0
        %1435 = vperm.xlu0 %1434, %v253
        %v1436 = vpop.permute.xlu0 %1435
        %v1438 = vadd.f32 %v1425, %v1436
        %v1439 = vadd.f32 %v1426, %v1436
        %v1440 = vadd.f32 %v1427, %v1436
        %v1441 = vadd.f32 %v1428, %v1436
        %v1442 = vadd.f32 %v1429, %v1436
        %v1443 = vadd.f32 %v1430, %v1436
        %v1444 = vadd.f32 %v1431, %v1436
        %v1445 = vadd.f32 %v1432, %v1436
        %vm1446 = vcmp.gt.f32.partialorder %v1438, 0.0
        %vm1447 = vcmp.gt.f32.partialorder %v1439, 0.0
        %vm1448 = vcmp.gt.f32.partialorder %v1440, 0.0
        %vm1449 = vcmp.gt.f32.partialorder %v1441, 0.0
        %vm1450 = vcmp.gt.f32.partialorder %v1442, 0.0
        %vm1451 = vcmp.gt.f32.partialorder %v1443, 0.0
        %vm1452 = vcmp.gt.f32.partialorder %v1444, 0.0
        %vm1453 = vcmp.gt.f32.partialorder %v1445, 0.0
        %v1454 = vmul.f32 %v1438, 0.01
        %v1455 = vmul.f32 %v1439, 0.01
        %v1456 = vmul.f32 %v1440, 0.01
        %v1457 = vmul.f32 %v1441, 0.01
        %v1458 = vmul.f32 %v1442, 0.01
        %v1459 = vmul.f32 %v1443, 0.01
        %v1460 = vmul.f32 %v1444, 0.01
        %v1461 = vmul.f32 %v1445, 0.01
        %v1462 = vsel %vm1446, %v1438, %v1454
        %v1463 = vsel %vm1447, %v1439, %v1455
        %v1464 = vsel %vm1448, %v1440, %v1456
        %v1465 = vsel %vm1449, %v1441, %v1457
        %v1466 = vsel %vm1450, %v1442, %v1458
        %v1467 = vsel %vm1451, %v1443, %v1459
        %v1468 = vsel %vm1452, %v1444, %v1460
        %v1469 = vsel %vm1453, %v1445, %v1461
        %v1470 = vadd.f32 %v1462, %v259
        %v1471 = vadd.f32 %v1463, %v267
        %v1472 = vadd.f32 %v1464, %v260
        %v1473 = vadd.f32 %v1465, %v268
        %v1474 = vadd.f32 %v1466, %v261
        %v1475 = vadd.f32 %v1467, %v269
        %v1476 = vadd.f32 %v1468, %v262
        %v1477 = vadd.f32 %v1469, %v270
        %v1486 = vcombine.low %v1470, %v1471
        %v1487 = vcombine.low %v1472, %v1473
        %v1488 = vcombine.low %v1474, %v1475
        %v1489 = vcombine.low %v1476, %v1477
        %1494 = vst [vmem:[%s241] sm:$0xff] %v1486
        %1495 = vst [vmem:[%s241 + $0x8] sm:$0xff] %v1487
        %1496 = vst [vmem:[%s241 + $0x10] sm:$0xff] %v1488
        %1497 = vst [vmem:[%s241 + $0x18] sm:$0xff] %v1489
        %s1498 = scalar_lea.vmem %s217, 32 [#allocation7]
        %v1499 = vld [vmem:[%s1498] sm:$0xff]
        %v1500 = vld [vmem:[%s1498 + $0x8] sm:$0xff]
        %v1501 = vld [vmem:[%s1498 + $0x10] sm:$0xff]
        %v1502 = vld [vmem:[%s1498 + $0x18] sm:$0xff]
        %v1507 = vcombine.high %v1499, %v1499
        %v1508 = vcombine.high %v1500, %v1500
        %v1509 = vcombine.high %v1501, %v1501
        %v1510 = vcombine.high %v1502, %v1502
        %1515 = vrot.lane.b32.xlu0 %v1499, 1
        %v1516 = vpop.permute.xlu0 %1515
        %1517 = vrot.lane.b32.xlu0 %v1507, 1
        %v1518 = vpop.permute.xlu0 %1517
        %1519 = vrot.lane.b32.xlu0 %v1500, 1
        %v1520 = vpop.permute.xlu0 %1519
        %1521 = vrot.lane.b32.xlu0 %v1508, 1
        %v1522 = vpop.permute.xlu0 %1521
        %1523 = vrot.lane.b32.xlu0 %v1501, 1
        %v1524 = vpop.permute.xlu0 %1523
        %1525 = vrot.lane.b32.xlu0 %v1509, 1
        %v1526 = vpop.permute.xlu0 %1525
        %1527 = vrot.lane.b32.xlu0 %v1502, 1
        %v1528 = vpop.permute.xlu0 %1527
        %1529 = vrot.lane.b32.xlu0 %v1510, 1
        %v1530 = vpop.permute.xlu0 %1529
        %v1531 = vsel %vm293, %v1528, %v1530
        %v1532 = vsel %vm293, %v1526, %v1528
        %v1533 = vsel %vm293, %v1524, %v1526
        %v1534 = vsel %vm293, %v1522, %v1524
        %v1535 = vsel %vm293, %v1520, %v1522
        %v1536 = vsel %vm293, %v1518, %v1520
        %v1537 = vsel %vm293, %v1516, %v1518
        %v1538 = vsel %vm293, %v1530, %v1516
        %v1539 = vmul.f32 %v1538, %v305
        %v1540 = vmul.f32 %v1537, %v309
        %v1541 = vmul.f32 %v1536, %v313
        %v1542 = vmul.f32 %v1535, %v317
        %v1543 = vmul.f32 %v1534, %v321
        %v1544 = vmul.f32 %v1533, %v325
        %v1545 = vmul.f32 %v1532, %v329
        %v1546 = vmul.f32 %v1531, %v333
        %1547 = vrot.lane.b32.xlu0 %v1499, 127
        %v1548 = vpop.permute.xlu0 %1547
        %1549 = vrot.lane.b32.xlu0 %v1507, 127
        %v1550 = vpop.permute.xlu0 %1549
        %1551 = vrot.lane.b32.xlu0 %v1500, 127
        %v1552 = vpop.permute.xlu0 %1551
        %1553 = vrot.lane.b32.xlu0 %v1508, 127
        %v1554 = vpop.permute.xlu0 %1553
        %1555 = vrot.lane.b32.xlu0 %v1501, 127
        %v1556 = vpop.permute.xlu0 %1555
        %1557 = vrot.lane.b32.xlu0 %v1509, 127
        %v1558 = vpop.permute.xlu0 %1557
        %1559 = vrot.lane.b32.xlu0 %v1502, 127
        %v1560 = vpop.permute.xlu0 %1559
        %1561 = vrot.lane.b32.xlu0 %v1510, 127
        %v1562 = vpop.permute.xlu0 %1561
        %v1563 = vsel %vm358, %v1560, %v1562
        %v1564 = vsel %vm358, %v1558, %v1560
        %v1565 = vsel %vm358, %v1556, %v1558
        %v1566 = vsel %vm358, %v1554, %v1556
        %v1567 = vsel %vm358, %v1552, %v1554
        %v1568 = vsel %vm358, %v1550, %v1552
        %v1569 = vsel %vm358, %v1548, %v1550
        %v1570 = vsel %vm358, %v1562, %v1548
        %v1571 = vmul.f32 %v1569, %v370
        %v1572 = vmul.f32 %v1568, %v374
        %v1573 = vmul.f32 %v1567, %v378
        %v1574 = vmul.f32 %v1566, %v382
        %v1575 = vmul.f32 %v1565, %v386
        %v1576 = vmul.f32 %v1564, %v390
        %v1577 = vmul.f32 %v1563, %v394
        %v1578 = vmul.f32 %v1570, %v398
        %1579 = vrot.lane.b32.xlu0 %v1539, 16
        %v1580 = vpop.permute.xlu0 %1579
        %1581 = vrot.lane.b32.xlu0 %v1540, 16
        %v1582 = vpop.permute.xlu0 %1581
        %1583 = vrot.lane.b32.xlu0 %v1541, 16
        %v1584 = vpop.permute.xlu0 %1583
        %1585 = vrot.lane.b32.xlu0 %v1542, 16
        %v1586 = vpop.permute.xlu0 %1585
        %1587 = vrot.lane.b32.xlu0 %v1543, 16
        %v1588 = vpop.permute.xlu0 %1587
        %1589 = vrot.lane.b32.xlu0 %v1544, 16
        %v1590 = vpop.permute.xlu0 %1589
        %1591 = vrot.lane.b32.xlu0 %v1545, 16
        %v1592 = vpop.permute.xlu0 %1591
        %1593 = vrot.lane.b32.xlu0 %v1546, 16
        %v1594 = vpop.permute.xlu0 %1593
        %v1595 = vsel %vm423, %v1592, %v1594
        %v1596 = vsel %vm423, %v1590, %v1592
        %v1597 = vsel %vm423, %v1588, %v1590
        %v1598 = vsel %vm423, %v1586, %v1588
        %v1599 = vsel %vm423, %v1584, %v1586
        %v1600 = vsel %vm423, %v1582, %v1584
        %v1601 = vsel %vm423, %v1580, %v1582
        %v1602 = vsel %vm423, %v1594, %v1580
        %v1603 = vmul.f32 %v1602, %v435
        %v1604 = vmul.f32 %v1601, %v439
        %v1605 = vmul.f32 %v1600, %v443
        %v1606 = vmul.f32 %v1599, %v447
        %v1607 = vmul.f32 %v1598, %v451
        %v1608 = vmul.f32 %v1597, %v455
        %v1609 = vmul.f32 %v1596, %v459
        %v1610 = vmul.f32 %v1595, %v463
        %1611 = vrot.lane.b32.xlu0 %v1499, 16
        %v1612 = vpop.permute.xlu0 %1611
        %1613 = vrot.lane.b32.xlu0 %v1507, 16
        %v1614 = vpop.permute.xlu0 %1613
        %1615 = vrot.lane.b32.xlu0 %v1500, 16
        %v1616 = vpop.permute.xlu0 %1615
        %1617 = vrot.lane.b32.xlu0 %v1508, 16
        %v1618 = vpop.permute.xlu0 %1617
        %1619 = vrot.lane.b32.xlu0 %v1501, 16
        %v1620 = vpop.permute.xlu0 %1619
        %1621 = vrot.lane.b32.xlu0 %v1509, 16
        %v1622 = vpop.permute.xlu0 %1621
        %1623 = vrot.lane.b32.xlu0 %v1502, 16
        %v1624 = vpop.permute.xlu0 %1623
        %1625 = vrot.lane.b32.xlu0 %v1510, 16
        %v1626 = vpop.permute.xlu0 %1625
        %v1627 = vsel %vm423, %v1624, %v1626
        %v1628 = vsel %vm423, %v1622, %v1624
        %v1629 = vsel %vm423, %v1620, %v1622
        %v1630 = vsel %vm423, %v1618, %v1620
        %v1631 = vsel %vm423, %v1616, %v1618
        %v1632 = vsel %vm423, %v1614, %v1616
        %v1633 = vsel %vm423, %v1612, %v1614
        %v1634 = vsel %vm423, %v1626, %v1612
        %v1635 = vmul.f32 %v1634, %v435
        %v1636 = vmul.f32 %v1633, %v439
        %v1637 = vmul.f32 %v1632, %v443
        %v1638 = vmul.f32 %v1631, %v447
        %v1639 = vmul.f32 %v1630, %v451
        %v1640 = vmul.f32 %v1629, %v455
        %v1641 = vmul.f32 %v1628, %v459
        %v1642 = vmul.f32 %v1627, %v463
        %1643 = vrot.lane.b32.xlu0 %v1571, 16
        %v1644 = vpop.permute.xlu0 %1643
        %1645 = vrot.lane.b32.xlu0 %v1572, 16
        %v1646 = vpop.permute.xlu0 %1645
        %1647 = vrot.lane.b32.xlu0 %v1573, 16
        %v1648 = vpop.permute.xlu0 %1647
        %1649 = vrot.lane.b32.xlu0 %v1574, 16
        %v1650 = vpop.permute.xlu0 %1649
        %1651 = vrot.lane.b32.xlu0 %v1575, 16
        %v1652 = vpop.permute.xlu0 %1651
        %1653 = vrot.lane.b32.xlu0 %v1576, 16
        %v1654 = vpop.permute.xlu0 %1653
        %1655 = vrot.lane.b32.xlu0 %v1577, 16
        %v1656 = vpop.permute.xlu0 %1655
        %1657 = vrot.lane.b32.xlu0 %v1578, 16
        %v1658 = vpop.permute.xlu0 %1657
        %v1659 = vsel %vm423, %v1656, %v1658
        %v1660 = vsel %vm423, %v1654, %v1656
        %v1661 = vsel %vm423, %v1652, %v1654
        %v1662 = vsel %vm423, %v1650, %v1652
        %v1663 = vsel %vm423, %v1648, %v1650
        %v1664 = vsel %vm423, %v1646, %v1648
        %v1665 = vsel %vm423, %v1644, %v1646
        %v1666 = vsel %vm423, %v1658, %v1644
        %v1667 = vmul.f32 %v1666, %v435
        %v1668 = vmul.f32 %v1665, %v439
        %v1669 = vmul.f32 %v1664, %v443
        %v1670 = vmul.f32 %v1663, %v447
        %v1671 = vmul.f32 %v1662, %v451
        %v1672 = vmul.f32 %v1661, %v455
        %v1673 = vmul.f32 %v1660, %v459
        %v1674 = vmul.f32 %v1659, %v463
        %1675 = vrot.lane.b32.xlu0 %v1539, 112
        %v1676 = vpop.permute.xlu0 %1675
        %1677 = vrot.lane.b32.xlu0 %v1540, 112
        %v1678 = vpop.permute.xlu0 %1677
        %1679 = vrot.lane.b32.xlu0 %v1541, 112
        %v1680 = vpop.permute.xlu0 %1679
        %1681 = vrot.lane.b32.xlu0 %v1542, 112
        %v1682 = vpop.permute.xlu0 %1681
        %1683 = vrot.lane.b32.xlu0 %v1543, 112
        %v1684 = vpop.permute.xlu0 %1683
        %1685 = vrot.lane.b32.xlu0 %v1544, 112
        %v1686 = vpop.permute.xlu0 %1685
        %1687 = vrot.lane.b32.xlu0 %v1545, 112
        %v1688 = vpop.permute.xlu0 %1687
        %1689 = vrot.lane.b32.xlu0 %v1546, 112
        %v1690 = vpop.permute.xlu0 %1689
        %v1691 = vsel %vm552, %v1688, %v1690
        %v1692 = vsel %vm552, %v1686, %v1688
        %v1693 = vsel %vm552, %v1684, %v1686
        %v1694 = vsel %vm552, %v1682, %v1684
        %v1695 = vsel %vm552, %v1680, %v1682
        %v1696 = vsel %vm552, %v1678, %v1680
        %v1697 = vsel %vm552, %v1676, %v1678
        %v1698 = vsel %vm552, %v1690, %v1676
        %v1699 = vmul.f32 %v1697, %v564
        %v1700 = vmul.f32 %v1696, %v568
        %v1701 = vmul.f32 %v1695, %v572
        %v1702 = vmul.f32 %v1694, %v576
        %v1703 = vmul.f32 %v1693, %v580
        %v1704 = vmul.f32 %v1692, %v584
        %v1705 = vmul.f32 %v1691, %v588
        %v1706 = vmul.f32 %v1698, %v592
        %1707 = vrot.lane.b32.xlu0 %v1499, 112
        %v1708 = vpop.permute.xlu0 %1707
        %1709 = vrot.lane.b32.xlu0 %v1507, 112
        %v1710 = vpop.permute.xlu0 %1709
        %1711 = vrot.lane.b32.xlu0 %v1500, 112
        %v1712 = vpop.permute.xlu0 %1711
        %1713 = vrot.lane.b32.xlu0 %v1508, 112
        %v1714 = vpop.permute.xlu0 %1713
        %1715 = vrot.lane.b32.xlu0 %v1501, 112
        %v1716 = vpop.permute.xlu0 %1715
        %1717 = vrot.lane.b32.xlu0 %v1509, 112
        %v1718 = vpop.permute.xlu0 %1717
        %1719 = vrot.lane.b32.xlu0 %v1502, 112
        %v1720 = vpop.permute.xlu0 %1719
        %1721 = vrot.lane.b32.xlu0 %v1510, 112
        %v1722 = vpop.permute.xlu0 %1721
        %v1723 = vsel %vm552, %v1720, %v1722
        %v1724 = vsel %vm552, %v1718, %v1720
        %v1725 = vsel %vm552, %v1716, %v1718
        %v1726 = vsel %vm552, %v1714, %v1716
        %v1727 = vsel %vm552, %v1712, %v1714
        %v1728 = vsel %vm552, %v1710, %v1712
        %v1729 = vsel %vm552, %v1708, %v1710
        %v1730 = vsel %vm552, %v1722, %v1708
        %v1731 = vmul.f32 %v1729, %v564
        %v1732 = vmul.f32 %v1728, %v568
        %v1733 = vmul.f32 %v1727, %v572
        %v1734 = vmul.f32 %v1726, %v576
        %v1735 = vmul.f32 %v1725, %v580
        %v1736 = vmul.f32 %v1724, %v584
        %v1737 = vmul.f32 %v1723, %v588
        %v1738 = vmul.f32 %v1730, %v592
        %1739 = vrot.lane.b32.xlu0 %v1571, 112
        %v1740 = vpop.permute.xlu0 %1739
        %1741 = vrot.lane.b32.xlu0 %v1572, 112
        %v1742 = vpop.permute.xlu0 %1741
        %1743 = vrot.lane.b32.xlu0 %v1573, 112
        %v1744 = vpop.permute.xlu0 %1743
        %1745 = vrot.lane.b32.xlu0 %v1574, 112
        %v1746 = vpop.permute.xlu0 %1745
        %1747 = vrot.lane.b32.xlu0 %v1575, 112
        %v1748 = vpop.permute.xlu0 %1747
        %1749 = vrot.lane.b32.xlu0 %v1576, 112
        %v1750 = vpop.permute.xlu0 %1749
        %1751 = vrot.lane.b32.xlu0 %v1577, 112
        %v1752 = vpop.permute.xlu0 %1751
        %1753 = vrot.lane.b32.xlu0 %v1578, 112
        %v1754 = vpop.permute.xlu0 %1753
        %v1755 = vsel %vm552, %v1752, %v1754
        %v1756 = vsel %vm552, %v1750, %v1752
        %v1757 = vsel %vm552, %v1748, %v1750
        %v1758 = vsel %vm552, %v1746, %v1748
        %v1759 = vsel %vm552, %v1744, %v1746
        %v1760 = vsel %vm552, %v1742, %v1744
        %v1761 = vsel %vm552, %v1740, %v1742
        %v1762 = vsel %vm552, %v1754, %v1740
        %v1763 = vmul.f32 %v1761, %v564
        %v1764 = vmul.f32 %v1760, %v568
        %v1765 = vmul.f32 %v1759, %v572
        %v1766 = vmul.f32 %v1758, %v576
        %v1767 = vmul.f32 %v1757, %v580
        %v1768 = vmul.f32 %v1756, %v584
        %v1769 = vmul.f32 %v1755, %v588
        %v1770 = vmul.f32 %v1762, %v592
        %v1779 = vrot.slane %v1635, 4
        %v1780 = vrot.slane %v1636, 4
        %v1781 = vrot.slane %v1637, 4
        %v1782 = vrot.slane %v1638, 4
        %v1783 = vrot.slane %v1639, 4
        %v1784 = vrot.slane %v1640, 4
        %v1785 = vrot.slane %v1641, 4
        %v1786 = vrot.slane %v1642, 4
        %v1803 = vrot.slane %v1539, 4
        %v1804 = vrot.slane %v1540, 4
        %v1805 = vrot.slane %v1541, 4
        %v1806 = vrot.slane %v1542, 4
        %v1807 = vrot.slane %v1543, 4
        %v1808 = vrot.slane %v1544, 4
        %v1809 = vrot.slane %v1545, 4
        %v1810 = vrot.slane %v1546, 4
        %v1827 = vrot.slane %v1571, 4
        %v1828 = vrot.slane %v1572, 4
        %v1829 = vrot.slane %v1573, 4
        %v1830 = vrot.slane %v1574, 4
        %v1831 = vrot.slane %v1575, 4
        %v1832 = vrot.slane %v1576, 4
        %v1833 = vrot.slane %v1577, 4
        %v1834 = vrot.slane %v1578, 4
        %v1851 = vrot.slane %v1731, 4
        %v1852 = vrot.slane %v1732, 4
        %v1853 = vrot.slane %v1733, 4
        %v1854 = vrot.slane %v1734, 4
        %v1855 = vrot.slane %v1735, 4
        %v1856 = vrot.slane %v1736, 4
        %v1857 = vrot.slane %v1737, 4
        %v1858 = vrot.slane %v1738, 4
        %v1867 = vsel %vm761, %v1603, %v1779
        %v1868 = vsel %vm761, %v1604, %v1780
        %v1869 = vsel %vm761, %v1605, %v1781
        %v1870 = vsel %vm761, %v1606, %v1782
        %v1871 = vsel %vm761, %v1607, %v1783
        %v1872 = vsel %vm761, %v1608, %v1784
        %v1873 = vsel %vm761, %v1609, %v1785
        %v1874 = vsel %vm761, %v1610, %v1786
        %v1875 = vsel %vm761, %v1667, %v1803
        %v1876 = vsel %vm761, %v1668, %v1804
        %v1877 = vsel %vm761, %v1669, %v1805
        %v1878 = vsel %vm761, %v1670, %v1806
        %v1879 = vsel %vm761, %v1671, %v1807
        %v1880 = vsel %vm761, %v1672, %v1808
        %v1881 = vsel %vm761, %v1673, %v1809
        %v1882 = vsel %vm761, %v1674, %v1810
        %v1883 = vsel %vm761, %v1499, %v1827
        %v1884 = vsel %vm761, %v1507, %v1828
        %v1885 = vsel %vm761, %v1500, %v1829
        %v1886 = vsel %vm761, %v1508, %v1830
        %v1887 = vsel %vm761, %v1501, %v1831
        %v1888 = vsel %vm761, %v1509, %v1832
        %v1889 = vsel %vm761, %v1502, %v1833
        %v1890 = vsel %vm761, %v1510, %v1834
        %v1891 = vsel %vm761, %v1699, %v1851
        %v1892 = vsel %vm761, %v1700, %v1852
        %v1893 = vsel %vm761, %v1701, %v1853
        %v1894 = vsel %vm761, %v1702, %v1854
        %v1895 = vsel %vm761, %v1703, %v1855
        %v1896 = vsel %vm761, %v1704, %v1856
        %v1897 = vsel %vm761, %v1705, %v1857
        %v1898 = vsel %vm761, %v1706, %v1858
        %v1899 = vpack.c.bf16 %v1875, %v1867
        %v1900 = vpack.c.bf16 %v1876, %v1868
        %v1901 = vpack.c.bf16 %v1877, %v1869
        %v1902 = vpack.c.bf16 %v1878, %v1870
        %v1903 = vpack.c.bf16 %v1879, %v1871
        %v1904 = vpack.c.bf16 %v1880, %v1872
        %v1905 = vpack.c.bf16 %v1881, %v1873
        %v1906 = vpack.c.bf16 %v1882, %v1874
        %v1907 = vpack.c.bf16 %v1891, %v1883
        %v1908 = vpack.c.bf16 %v1892, %v1884
        %v1909 = vpack.c.bf16 %v1893, %v1885
        %v1910 = vpack.c.bf16 %v1894, %v1886
        %v1911 = vpack.c.bf16 %v1895, %v1887
        %v1912 = vpack.c.bf16 %v1896, %v1888
        %v1913 = vpack.c.bf16 %v1897, %v1889
        %v1914 = vpack.c.bf16 %v1898, %v1890
        %v1915 = vpack.c.bf16 %v1763, %v1763
        %v1916 = vpack.c.bf16 %v1764, %v1764
        %v1917 = vpack.c.bf16 %v1765, %v1765
        %v1918 = vpack.c.bf16 %v1766, %v1766
        %v1919 = vpack.c.bf16 %v1767, %v1767
        %v1920 = vpack.c.bf16 %v1768, %v1768
        %v1921 = vpack.c.bf16 %v1769, %v1769
        %v1922 = vpack.c.bf16 %v1770, %v1770
        %v1924 = vsel %vm822, %v1915, 0
        %v1927 = vsel %vm822, %v1916, 0
        %v1930 = vsel %vm822, %v1917, 0
        %v1933 = vsel %vm822, %v1918, 0
        %v1936 = vsel %vm822, %v1919, 0
        %v1939 = vsel %vm822, %v1920, 0
        %v1942 = vsel %vm822, %v1921, 0
        %v1945 = vsel %vm822, %v1922, 0
        %1947 = vmatprep.subr.bf16.mxu0 0
        %1948 = vmatpush1.bf16.msra.mxu0 0
        %1949 = vmatprep.subr.bf16.mxu0 0
        %1950 = vmatpush1.bf16.msra.mxu0 0
        %1951 = vmatprep.subr.bf16.mxu0 0
        %1952 = vmatpush1.bf16.msra.mxu0 0
        %1953 = vmatprep.subr.bf16.mxu0 0
        %1954 = vmatpush1.bf16.msra.mxu0 0
        %1955 = vmatprep.subr.bf16.mxu0 0
        %1956 = vmatpush1.bf16.msra.mxu0 0
        %1957 = vmatprep.subr.bf16.mxu0 %v1927
        %1958 = vmatpush1.bf16.msra.mxu0 %v1924
        %1959 = vmatprep.subr.bf16.mxu0 %v1908
        %1960 = vmatpush1.bf16.msra.mxu0 %v1907
        %1961 = vmatprep.subr.bf16.mxu0 %v1900
        %1962 = vmatpush1.bf16.msra.mxu0 %v1899
        %1963 = vmatprep.subr.bf16.mxu0 0
        %1964 = vmatpush2.bf16.msra.mxu0 0
        %1965 = vmatprep.subr.bf16.mxu0 0
        %1966 = vmatpush2.bf16.msra.mxu0 0
        %1967 = vmatprep.subr.bf16.mxu0 0
        %1968 = vmatpush2.bf16.msra.mxu0 0
        %1969 = vmatprep.subr.bf16.mxu0 0
        %1970 = vmatpush2.bf16.msra.mxu0 0
        %1971 = vmatprep.subr.bf16.mxu0 0
        %1972 = vmatpush2.bf16.msra.mxu0 0
        %1973 = vmatprep.subr.bf16.mxu0 0
        %1974 = vmatpush2.bf16.msra.mxu0 0
        %1975 = vmatprep.subr.bf16.mxu0 0
        %1976 = vmatpush2.bf16.msra.mxu0 0
        %1977 = vmatprep.subr.bf16.mxu0 0
        %1978 = vmatpush2.bf16.msra.mxu0 0
        %1979 = vmatprep.mubr.bf16.mxu0 0
        %1980 = vmatmul.mubr.bf16.gmra.mxu0 %v820
        %v1981 = vpop.f32.mrf.mxu0
        %v1982 = vadd.f32 0.0, %v1981
        %v1983 = vpop.f32.mrf.mxu0
        %v1984 = vadd.f32 0.0, %v1983
        %v1985 = vpop.f32.mrf.mxu0
        %v1986 = vpop.f32.mrf.mxu0
        %1987 = vdwg.mxu0
        %1988 = vmatprep.subr.bf16.mxu0 0
        %1989 = vmatpush1.bf16.msra.mxu0 0
        %1990 = vmatprep.subr.bf16.mxu0 0
        %1991 = vmatpush1.bf16.msra.mxu0 0
        %1992 = vmatprep.subr.bf16.mxu0 0
        %1993 = vmatpush1.bf16.msra.mxu0 0
        %1994 = vmatprep.subr.bf16.mxu0 0
        %1995 = vmatpush1.bf16.msra.mxu0 0
        %1996 = vmatprep.subr.bf16.mxu0 0
        %1997 = vmatpush1.bf16.msra.mxu0 0
        %1998 = vmatprep.subr.bf16.mxu0 %v1933
        %1999 = vmatpush1.bf16.msra.mxu0 %v1930
        %2000 = vmatprep.subr.bf16.mxu0 %v1910
        %2001 = vmatpush1.bf16.msra.mxu0 %v1909
        %2002 = vmatprep.subr.bf16.mxu0 %v1902
        %2003 = vmatpush1.bf16.msra.mxu0 %v1901
        %2004 = vmatprep.subr.bf16.mxu0 0
        %2005 = vmatpush2.bf16.msra.mxu0 0
        %2006 = vmatprep.subr.bf16.mxu0 0
        %2007 = vmatpush2.bf16.msra.mxu0 0
        %2008 = vmatprep.subr.bf16.mxu0 0
        %2009 = vmatpush2.bf16.msra.mxu0 0
        %2010 = vmatprep.subr.bf16.mxu0 0
        %2011 = vmatpush2.bf16.msra.mxu0 0
        %2012 = vmatprep.subr.bf16.mxu0 0
        %2013 = vmatpush2.bf16.msra.mxu0 0
        %2014 = vmatprep.subr.bf16.mxu0 0
        %2015 = vmatpush2.bf16.msra.mxu0 0
        %2016 = vmatprep.subr.bf16.mxu0 0
        %2017 = vmatpush2.bf16.msra.mxu0 0
        %2018 = vmatprep.subr.bf16.mxu0 0
        %2019 = vmatpush2.bf16.msra.mxu0 0
        %2020 = vmatprep.mubr.bf16.mxu0 0
        %2021 = vmatmul.mubr.bf16.gmra.mxu0 %v820
        %v2022 = vpop.f32.mrf.mxu0
        %v2023 = vadd.f32 0.0, %v2022
        %v2024 = vpop.f32.mrf.mxu0
        %v2025 = vadd.f32 0.0, %v2024
        %v2026 = vpop.f32.mrf.mxu0
        %v2027 = vpop.f32.mrf.mxu0
        %2028 = vdwg.mxu0
        %2029 = vmatprep.subr.bf16.mxu0 0
        %2030 = vmatpush1.bf16.msra.mxu0 0
        %2031 = vmatprep.subr.bf16.mxu0 0
        %2032 = vmatpush1.bf16.msra.mxu0 0
        %2033 = vmatprep.subr.bf16.mxu0 0
        %2034 = vmatpush1.bf16.msra.mxu0 0
        %2035 = vmatprep.subr.bf16.mxu0 0
        %2036 = vmatpush1.bf16.msra.mxu0 0
        %2037 = vmatprep.subr.bf16.mxu0 0
        %2038 = vmatpush1.bf16.msra.mxu0 0
        %2039 = vmatprep.subr.bf16.mxu0 %v1939
        %2040 = vmatpush1.bf16.msra.mxu0 %v1936
        %2041 = vmatprep.subr.bf16.mxu0 %v1912
        %2042 = vmatpush1.bf16.msra.mxu0 %v1911
        %2043 = vmatprep.subr.bf16.mxu0 %v1904
        %2044 = vmatpush1.bf16.msra.mxu0 %v1903
        %2045 = vmatprep.subr.bf16.mxu0 0
        %2046 = vmatpush2.bf16.msra.mxu0 0
        %2047 = vmatprep.subr.bf16.mxu0 0
        %2048 = vmatpush2.bf16.msra.mxu0 0
        %2049 = vmatprep.subr.bf16.mxu0 0
        %2050 = vmatpush2.bf16.msra.mxu0 0
        %2051 = vmatprep.subr.bf16.mxu0 0
        %2052 = vmatpush2.bf16.msra.mxu0 0
        %2053 = vmatprep.subr.bf16.mxu0 0
        %2054 = vmatpush2.bf16.msra.mxu0 0
        %2055 = vmatprep.subr.bf16.mxu0 0
        %2056 = vmatpush2.bf16.msra.mxu0 0
        %2057 = vmatprep.subr.bf16.mxu0 0
        %2058 = vmatpush2.bf16.msra.mxu0 0
        %2059 = vmatprep.subr.bf16.mxu0 0
        %2060 = vmatpush2.bf16.msra.mxu0 0
        %2061 = vmatprep.mubr.bf16.mxu0 0
        %2062 = vmatmul.mubr.bf16.gmra.mxu0 %v820
        %v2063 = vpop.f32.mrf.mxu0
        %v2064 = vadd.f32 0.0, %v2063
        %v2065 = vpop.f32.mrf.mxu0
        %v2066 = vadd.f32 0.0, %v2065
        %v2067 = vpop.f32.mrf.mxu0
        %v2068 = vpop.f32.mrf.mxu0
        %2069 = vdwg.mxu0
        %2070 = vmatprep.subr.bf16.mxu0 0
        %2071 = vmatpush1.bf16.msra.mxu0 0
        %2072 = vmatprep.subr.bf16.mxu0 0
        %2073 = vmatpush1.bf16.msra.mxu0 0
        %2074 = vmatprep.subr.bf16.mxu0 0
        %2075 = vmatpush1.bf16.msra.mxu0 0
        %2076 = vmatprep.subr.bf16.mxu0 0
        %2077 = vmatpush1.bf16.msra.mxu0 0
        %2078 = vmatprep.subr.bf16.mxu0 0
        %2079 = vmatpush1.bf16.msra.mxu0 0
        %2080 = vmatprep.subr.bf16.mxu0 %v1945
        %2081 = vmatpush1.bf16.msra.mxu0 %v1942
        %2082 = vmatprep.subr.bf16.mxu0 %v1914
        %2083 = vmatpush1.bf16.msra.mxu0 %v1913
        %2084 = vmatprep.subr.bf16.mxu0 %v1906
        %2085 = vmatpush1.bf16.msra.mxu0 %v1905
        %2086 = vmatprep.subr.bf16.mxu0 0
        %2087 = vmatpush2.bf16.msra.mxu0 0
        %2088 = vmatprep.subr.bf16.mxu0 0
        %2089 = vmatpush2.bf16.msra.mxu0 0
        %2090 = vmatprep.subr.bf16.mxu0 0
        %2091 = vmatpush2.bf16.msra.mxu0 0
        %2092 = vmatprep.subr.bf16.mxu0 0
        %2093 = vmatpush2.bf16.msra.mxu0 0
        %2094 = vmatprep.subr.bf16.mxu0 0
        %2095 = vmatpush2.bf16.msra.mxu0 0
        %2096 = vmatprep.subr.bf16.mxu0 0
        %2097 = vmatpush2.bf16.msra.mxu0 0
        %2098 = vmatprep.subr.bf16.mxu0 0
        %2099 = vmatpush2.bf16.msra.mxu0 0
        %2100 = vmatprep.subr.bf16.mxu0 0
        %2101 = vmatpush2.bf16.msra.mxu0 0
        %2102 = vmatprep.mubr.bf16.mxu0 0
        %2103 = vmatmul.mubr.bf16.gmra.mxu0 %v820
        %v2104 = vpop.f32.mrf.mxu0
        %v2105 = vadd.f32 0.0, %v2104
        %v2106 = vpop.f32.mrf.mxu0
        %v2107 = vadd.f32 0.0, %v2106
        %v2108 = vpop.f32.mrf.mxu0
        %v2109 = vpop.f32.mrf.mxu0
        %2110 = vdwg.mxu0
        %2111 = vmatprep.subr.bf16.mxu0 0
        %2112 = vmatpush1.bf16.msra.mxu0 0
        %2113 = vmatprep.subr.bf16.mxu0 0
        %2114 = vmatpush1.bf16.msra.mxu0 0
        %2115 = vmatprep.subr.bf16.mxu0 0
        %2116 = vmatpush1.bf16.msra.mxu0 0
        %2117 = vmatprep.subr.bf16.mxu0 0
        %2118 = vmatpush1.bf16.msra.mxu0 0
        %2119 = vmatprep.subr.bf16.mxu0 0
        %2120 = vmatpush1.bf16.msra.mxu0 0
        %2121 = vmatprep.subr.bf16.mxu0 %v1927
        %2122 = vmatpush1.bf16.msra.mxu0 %v1924
        %2123 = vmatprep.subr.bf16.mxu0 %v1908
        %2124 = vmatpush1.bf16.msra.mxu0 %v1907
        %2125 = vmatprep.subr.bf16.mxu0 %v1900
        %2126 = vmatpush1.bf16.msra.mxu0 %v1899
        %2127 = vmatprep.subr.bf16.mxu0 0
        %2128 = vmatpush2.bf16.msra.mxu0 0
        %2129 = vmatprep.subr.bf16.mxu0 0
        %2130 = vmatpush2.bf16.msra.mxu0 0
        %2131 = vmatprep.subr.bf16.mxu0 0
        %2132 = vmatpush2.bf16.msra.mxu0 0
        %2133 = vmatprep.subr.bf16.mxu0 0
        %2134 = vmatpush2.bf16.msra.mxu0 0
        %2135 = vmatprep.subr.bf16.mxu0 0
        %2136 = vmatpush2.bf16.msra.mxu0 0
        %2137 = vmatprep.subr.bf16.mxu0 0
        %2138 = vmatpush2.bf16.msra.mxu0 0
        %2139 = vmatprep.subr.bf16.mxu0 0
        %2140 = vmatpush2.bf16.msra.mxu0 0
        %2141 = vmatprep.subr.bf16.mxu0 0
        %2142 = vmatpush2.bf16.msra.mxu0 0
        %2143 = vmatprep.mubr.bf16.mxu0 0
        %2144 = vmatmul.mubr.bf16.gmra.mxu0 %v1012
        %v2145 = vpop.f32.mrf.mxu0
        %v2146 = vadd.f32 0.0, %v2145
        %v2147 = vpop.f32.mrf.mxu0
        %v2148 = vadd.f32 0.0, %v2147
        %v2149 = vpop.f32.mrf.mxu0
        %v2150 = vpop.f32.mrf.mxu0
        %2151 = vdwg.mxu0
        %2152 = vmatprep.subr.bf16.mxu0 0
        %2153 = vmatpush1.bf16.msra.mxu0 0
        %2154 = vmatprep.subr.bf16.mxu0 0
        %2155 = vmatpush1.bf16.msra.mxu0 0
        %2156 = vmatprep.subr.bf16.mxu0 0
        %2157 = vmatpush1.bf16.msra.mxu0 0
        %2158 = vmatprep.subr.bf16.mxu0 0
        %2159 = vmatpush1.bf16.msra.mxu0 0
        %2160 = vmatprep.subr.bf16.mxu0 0
        %2161 = vmatpush1.bf16.msra.mxu0 0
        %2162 = vmatprep.subr.bf16.mxu0 %v1933
        %2163 = vmatpush1.bf16.msra.mxu0 %v1930
        %2164 = vmatprep.subr.bf16.mxu0 %v1910
        %2165 = vmatpush1.bf16.msra.mxu0 %v1909
        %2166 = vmatprep.subr.bf16.mxu0 %v1902
        %2167 = vmatpush1.bf16.msra.mxu0 %v1901
        %2168 = vmatprep.subr.bf16.mxu0 0
        %2169 = vmatpush2.bf16.msra.mxu0 0
        %2170 = vmatprep.subr.bf16.mxu0 0
        %2171 = vmatpush2.bf16.msra.mxu0 0
        %2172 = vmatprep.subr.bf16.mxu0 0
        %2173 = vmatpush2.bf16.msra.mxu0 0
        %2174 = vmatprep.subr.bf16.mxu0 0
        %2175 = vmatpush2.bf16.msra.mxu0 0
        %2176 = vmatprep.subr.bf16.mxu0 0
        %2177 = vmatpush2.bf16.msra.mxu0 0
        %2178 = vmatprep.subr.bf16.mxu0 0
        %2179 = vmatpush2.bf16.msra.mxu0 0
        %2180 = vmatprep.subr.bf16.mxu0 0
        %2181 = vmatpush2.bf16.msra.mxu0 0
        %2182 = vmatprep.subr.bf16.mxu0 0
        %2183 = vmatpush2.bf16.msra.mxu0 0
        %2184 = vmatprep.mubr.bf16.mxu0 0
        %2185 = vmatmul.mubr.bf16.gmra.mxu0 %v1012
        %v2186 = vpop.f32.mrf.mxu0
        %v2187 = vadd.f32 0.0, %v2186
        %v2188 = vpop.f32.mrf.mxu0
        %v2189 = vadd.f32 0.0, %v2188
        %v2190 = vpop.f32.mrf.mxu0
        %v2191 = vpop.f32.mrf.mxu0
        %2192 = vdwg.mxu0
        %2193 = vmatprep.subr.bf16.mxu0 0
        %2194 = vmatpush1.bf16.msra.mxu0 0
        %2195 = vmatprep.subr.bf16.mxu0 0
        %2196 = vmatpush1.bf16.msra.mxu0 0
        %2197 = vmatprep.subr.bf16.mxu0 0
        %2198 = vmatpush1.bf16.msra.mxu0 0
        %2199 = vmatprep.subr.bf16.mxu0 0
        %2200 = vmatpush1.bf16.msra.mxu0 0
        %2201 = vmatprep.subr.bf16.mxu0 0
        %2202 = vmatpush1.bf16.msra.mxu0 0
        %2203 = vmatprep.subr.bf16.mxu0 %v1939
        %2204 = vmatpush1.bf16.msra.mxu0 %v1936
        %2205 = vmatprep.subr.bf16.mxu0 %v1912
        %2206 = vmatpush1.bf16.msra.mxu0 %v1911
        %2207 = vmatprep.subr.bf16.mxu0 %v1904
        %2208 = vmatpush1.bf16.msra.mxu0 %v1903
        %2209 = vmatprep.subr.bf16.mxu0 0
        %2210 = vmatpush2.bf16.msra.mxu0 0
        %2211 = vmatprep.subr.bf16.mxu0 0
        %2212 = vmatpush2.bf16.msra.mxu0 0
        %2213 = vmatprep.subr.bf16.mxu0 0
        %2214 = vmatpush2.bf16.msra.mxu0 0
        %2215 = vmatprep.subr.bf16.mxu0 0
        %2216 = vmatpush2.bf16.msra.mxu0 0
        %2217 = vmatprep.subr.bf16.mxu0 0
        %2218 = vmatpush2.bf16.msra.mxu0 0
        %2219 = vmatprep.subr.bf16.mxu0 0
        %2220 = vmatpush2.bf16.msra.mxu0 0
        %2221 = vmatprep.subr.bf16.mxu0 0
        %2222 = vmatpush2.bf16.msra.mxu0 0
        %2223 = vmatprep.subr.bf16.mxu0 0
        %2224 = vmatpush2.bf16.msra.mxu0 0
        %2225 = vmatprep.mubr.bf16.mxu0 0
        %2226 = vmatmul.mubr.bf16.gmra.mxu0 %v1012
        %v2227 = vpop.f32.mrf.mxu0
        %v2228 = vadd.f32 0.0, %v2227
        %v2229 = vpop.f32.mrf.mxu0
        %v2230 = vadd.f32 0.0, %v2229
        %v2231 = vpop.f32.mrf.mxu0
        %v2232 = vpop.f32.mrf.mxu0
        %2233 = vdwg.mxu0
        %2234 = vmatprep.subr.bf16.mxu0 0
        %2235 = vmatpush1.bf16.msra.mxu0 0
        %2236 = vmatprep.subr.bf16.mxu0 0
        %2237 = vmatpush1.bf16.msra.mxu0 0
        %2238 = vmatprep.subr.bf16.mxu0 0
        %2239 = vmatpush1.bf16.msra.mxu0 0
        %2240 = vmatprep.subr.bf16.mxu0 0
        %2241 = vmatpush1.bf16.msra.mxu0 0
        %2242 = vmatprep.subr.bf16.mxu0 0
        %2243 = vmatpush1.bf16.msra.mxu0 0
        %2244 = vmatprep.subr.bf16.mxu0 %v1945
        %2245 = vmatpush1.bf16.msra.mxu0 %v1942
        %2246 = vmatprep.subr.bf16.mxu0 %v1914
        %2247 = vmatpush1.bf16.msra.mxu0 %v1913
        %2248 = vmatprep.subr.bf16.mxu0 %v1906
        %2249 = vmatpush1.bf16.msra.mxu0 %v1905
        %2250 = vmatprep.subr.bf16.mxu0 0
        %2251 = vmatpush2.bf16.msra.mxu0 0
        %2252 = vmatprep.subr.bf16.mxu0 0
        %2253 = vmatpush2.bf16.msra.mxu0 0
        %2254 = vmatprep.subr.bf16.mxu0 0
        %2255 = vmatpush2.bf16.msra.mxu0 0
        %2256 = vmatprep.subr.bf16.mxu0 0
        %2257 = vmatpush2.bf16.msra.mxu0 0
        %2258 = vmatprep.subr.bf16.mxu0 0
        %2259 = vmatpush2.bf16.msra.mxu0 0
        %2260 = vmatprep.subr.bf16.mxu0 0
        %2261 = vmatpush2.bf16.msra.mxu0 0
        %2262 = vmatprep.subr.bf16.mxu0 0
        %2263 = vmatpush2.bf16.msra.mxu0 0
        %2264 = vmatprep.subr.bf16.mxu0 0
        %2265 = vmatpush2.bf16.msra.mxu0 0
        %2266 = vmatprep.mubr.bf16.mxu0 0
        %2267 = vmatmul.mubr.bf16.gmra.mxu0 %v1012
        %v2268 = vpop.f32.mrf.mxu0
        %v2269 = vadd.f32 0.0, %v2268
        %v2270 = vpop.f32.mrf.mxu0
        %v2271 = vadd.f32 0.0, %v2270
        %v2272 = vpop.f32.mrf.mxu0
        %v2273 = vpop.f32.mrf.mxu0
        %2274 = vdwg.mxu0
        %v2275 = vmul.f32 %v1181, %v2107
        %v2276 = vmul.f32 %v1185, %v1982
        %v2277 = vmul.f32 %v1189, %v1984
        %v2278 = vmul.f32 %v1193, %v2023
        %v2279 = vmul.f32 %v1197, %v2025
        %v2280 = vmul.f32 %v1201, %v2064
        %v2281 = vmul.f32 %v1205, %v2066
        %v2282 = vmul.f32 %v1209, %v2105
        %2283 = vmatprep.subr.bf16.mxu0 0
        %2284 = vmatpush1.bf16.msra.mxu0 0
        %2285 = vmatprep.subr.bf16.mxu0 0
        %2286 = vmatpush1.bf16.msra.mxu0 0
        %2287 = vmatprep.subr.bf16.mxu0 0
        %2288 = vmatpush1.bf16.msra.mxu0 0
        %2289 = vmatprep.subr.bf16.mxu0 0
        %2290 = vmatpush1.bf16.msra.mxu0 0
        %2291 = vmatprep.subr.bf16.mxu0 0
        %2292 = vmatpush1.bf16.msra.mxu0 0
        %2293 = vmatprep.subr.bf16.mxu0 %v1927
        %2294 = vmatpush1.bf16.msra.mxu0 %v1924
        %2295 = vmatprep.subr.bf16.mxu0 %v1908
        %2296 = vmatpush1.bf16.msra.mxu0 %v1907
        %2297 = vmatprep.subr.bf16.mxu0 %v1900
        %2298 = vmatpush1.bf16.msra.mxu0 %v1899
        %2299 = vmatprep.subr.bf16.mxu0 0
        %2300 = vmatpush2.bf16.msra.mxu0 0
        %2301 = vmatprep.subr.bf16.mxu0 0
        %2302 = vmatpush2.bf16.msra.mxu0 0
        %2303 = vmatprep.subr.bf16.mxu0 0
        %2304 = vmatpush2.bf16.msra.mxu0 0
        %2305 = vmatprep.subr.bf16.mxu0 0
        %2306 = vmatpush2.bf16.msra.mxu0 0
        %2307 = vmatprep.subr.bf16.mxu0 0
        %2308 = vmatpush2.bf16.msra.mxu0 0
        %2309 = vmatprep.subr.bf16.mxu0 0
        %2310 = vmatpush2.bf16.msra.mxu0 0
        %2311 = vmatprep.subr.bf16.mxu0 0
        %2312 = vmatpush2.bf16.msra.mxu0 0
        %2313 = vmatprep.subr.bf16.mxu0 0
        %2314 = vmatpush2.bf16.msra.mxu0 0
        %2315 = vmatprep.mubr.bf16.mxu0 0
        %2316 = vmatmul.mubr.bf16.gmra.mxu0 %v1219
        %v2317 = vpop.f32.mrf.mxu0
        %v2318 = vadd.f32 %v2275, %v2317
        %v2319 = vpop.f32.mrf.mxu0
        %v2320 = vadd.f32 %v2276, %v2319
        %v2321 = vpop.f32.mrf.mxu0
        %v2322 = vpop.f32.mrf.mxu0
        %2323 = vdwg.mxu0
        %2324 = vmatprep.subr.bf16.mxu0 0
        %2325 = vmatpush1.bf16.msra.mxu0 0
        %2326 = vmatprep.subr.bf16.mxu0 0
        %2327 = vmatpush1.bf16.msra.mxu0 0
        %2328 = vmatprep.subr.bf16.mxu0 0
        %2329 = vmatpush1.bf16.msra.mxu0 0
        %2330 = vmatprep.subr.bf16.mxu0 0
        %2331 = vmatpush1.bf16.msra.mxu0 0
        %2332 = vmatprep.subr.bf16.mxu0 0
        %2333 = vmatpush1.bf16.msra.mxu0 0
        %2334 = vmatprep.subr.bf16.mxu0 %v1933
        %2335 = vmatpush1.bf16.msra.mxu0 %v1930
        %2336 = vmatprep.subr.bf16.mxu0 %v1910
        %2337 = vmatpush1.bf16.msra.mxu0 %v1909
        %2338 = vmatprep.subr.bf16.mxu0 %v1902
        %2339 = vmatpush1.bf16.msra.mxu0 %v1901
        %2340 = vmatprep.subr.bf16.mxu0 0
        %2341 = vmatpush2.bf16.msra.mxu0 0
        %2342 = vmatprep.subr.bf16.mxu0 0
        %2343 = vmatpush2.bf16.msra.mxu0 0
        %2344 = vmatprep.subr.bf16.mxu0 0
        %2345 = vmatpush2.bf16.msra.mxu0 0
        %2346 = vmatprep.subr.bf16.mxu0 0
        %2347 = vmatpush2.bf16.msra.mxu0 0
        %2348 = vmatprep.subr.bf16.mxu0 0
        %2349 = vmatpush2.bf16.msra.mxu0 0
        %2350 = vmatprep.subr.bf16.mxu0 0
        %2351 = vmatpush2.bf16.msra.mxu0 0
        %2352 = vmatprep.subr.bf16.mxu0 0
        %2353 = vmatpush2.bf16.msra.mxu0 0
        %2354 = vmatprep.subr.bf16.mxu0 0
        %2355 = vmatpush2.bf16.msra.mxu0 0
        %2356 = vmatprep.mubr.bf16.mxu0 0
        %2357 = vmatmul.mubr.bf16.gmra.mxu0 %v1219
        %v2358 = vpop.f32.mrf.mxu0
        %v2359 = vadd.f32 %v2277, %v2358
        %v2360 = vpop.f32.mrf.mxu0
        %v2361 = vadd.f32 %v2278, %v2360
        %v2362 = vpop.f32.mrf.mxu0
        %v2363 = vpop.f32.mrf.mxu0
        %2364 = vdwg.mxu0
        %2365 = vmatprep.subr.bf16.mxu0 0
        %2366 = vmatpush1.bf16.msra.mxu0 0
        %2367 = vmatprep.subr.bf16.mxu0 0
        %2368 = vmatpush1.bf16.msra.mxu0 0
        %2369 = vmatprep.subr.bf16.mxu0 0
        %2370 = vmatpush1.bf16.msra.mxu0 0
        %2371 = vmatprep.subr.bf16.mxu0 0
        %2372 = vmatpush1.bf16.msra.mxu0 0
        %2373 = vmatprep.subr.bf16.mxu0 0
        %2374 = vmatpush1.bf16.msra.mxu0 0
        %2375 = vmatprep.subr.bf16.mxu0 %v1939
        %2376 = vmatpush1.bf16.msra.mxu0 %v1936
        %2377 = vmatprep.subr.bf16.mxu0 %v1912
        %2378 = vmatpush1.bf16.msra.mxu0 %v1911
        %2379 = vmatprep.subr.bf16.mxu0 %v1904
        %2380 = vmatpush1.bf16.msra.mxu0 %v1903
        %2381 = vmatprep.subr.bf16.mxu0 0
        %2382 = vmatpush2.bf16.msra.mxu0 0
        %2383 = vmatprep.subr.bf16.mxu0 0
        %2384 = vmatpush2.bf16.msra.mxu0 0
        %2385 = vmatprep.subr.bf16.mxu0 0
        %2386 = vmatpush2.bf16.msra.mxu0 0
        %2387 = vmatprep.subr.bf16.mxu0 0
        %2388 = vmatpush2.bf16.msra.mxu0 0
        %2389 = vmatprep.subr.bf16.mxu0 0
        %2390 = vmatpush2.bf16.msra.mxu0 0
        %2391 = vmatprep.subr.bf16.mxu0 0
        %2392 = vmatpush2.bf16.msra.mxu0 0
        %2393 = vmatprep.subr.bf16.mxu0 0
        %2394 = vmatpush2.bf16.msra.mxu0 0
        %2395 = vmatprep.subr.bf16.mxu0 0
        %2396 = vmatpush2.bf16.msra.mxu0 0
        %2397 = vmatprep.mubr.bf16.mxu0 0
        %2398 = vmatmul.mubr.bf16.gmra.mxu0 %v1219
        %v2399 = vpop.f32.mrf.mxu0
        %v2400 = vadd.f32 %v2279, %v2399
        %v2401 = vpop.f32.mrf.mxu0
        %v2402 = vadd.f32 %v2280, %v2401
        %v2403 = vpop.f32.mrf.mxu0
        %v2404 = vpop.f32.mrf.mxu0
        %2405 = vdwg.mxu0
        %2406 = vmatprep.subr.bf16.mxu0 0
        %2407 = vmatpush1.bf16.msra.mxu0 0
        %2408 = vmatprep.subr.bf16.mxu0 0
        %2409 = vmatpush1.bf16.msra.mxu0 0
        %2410 = vmatprep.subr.bf16.mxu0 0
        %2411 = vmatpush1.bf16.msra.mxu0 0
        %2412 = vmatprep.subr.bf16.mxu0 0
        %2413 = vmatpush1.bf16.msra.mxu0 0
        %2414 = vmatprep.subr.bf16.mxu0 0
        %2415 = vmatpush1.bf16.msra.mxu0 0
        %2416 = vmatprep.subr.bf16.mxu0 %v1945
        %2417 = vmatpush1.bf16.msra.mxu0 %v1942
        %2418 = vmatprep.subr.bf16.mxu0 %v1914
        %2419 = vmatpush1.bf16.msra.mxu0 %v1913
        %2420 = vmatprep.subr.bf16.mxu0 %v1906
        %2421 = vmatpush1.bf16.msra.mxu0 %v1905
        %2422 = vmatprep.subr.bf16.mxu0 0
        %2423 = vmatpush2.bf16.msra.mxu0 0
        %2424 = vmatprep.subr.bf16.mxu0 0
        %2425 = vmatpush2.bf16.msra.mxu0 0
        %2426 = vmatprep.subr.bf16.mxu0 0
        %2427 = vmatpush2.bf16.msra.mxu0 0
        %2428 = vmatprep.subr.bf16.mxu0 0
        %2429 = vmatpush2.bf16.msra.mxu0 0
        %2430 = vmatprep.subr.bf16.mxu0 0
        %2431 = vmatpush2.bf16.msra.mxu0 0
        %2432 = vmatprep.subr.bf16.mxu0 0
        %2433 = vmatpush2.bf16.msra.mxu0 0
        %2434 = vmatprep.subr.bf16.mxu0 0
        %2435 = vmatpush2.bf16.msra.mxu0 0
        %2436 = vmatprep.subr.bf16.mxu0 0
        %2437 = vmatpush2.bf16.msra.mxu0 0
        %2438 = vmatprep.mubr.bf16.mxu0 0
        %2439 = vmatmul.mubr.bf16.gmra.mxu0 %v1219
        %v2440 = vpop.f32.mrf.mxu0
        %v2441 = vadd.f32 %v2281, %v2440
        %v2442 = vpop.f32.mrf.mxu0
        %v2443 = vadd.f32 %v2282, %v2442
        %v2444 = vpop.f32.mrf.mxu0
        %v2445 = vpop.f32.mrf.mxu0
        %2446 = vdwg.mxu0
        %v2447 = vmul.f32 %v1388, %v2148
        %v2448 = vmul.f32 %v1392, %v2187
        %v2449 = vmul.f32 %v1396, %v2189
        %v2450 = vmul.f32 %v1400, %v2228
        %v2451 = vmul.f32 %v1404, %v2230
        %v2452 = vmul.f32 %v1408, %v2269
        %v2453 = vmul.f32 %v1412, %v2271
        %v2454 = vmul.f32 %v1416, %v2146
        %v2455 = vadd.f32 %v2318, %v2447
        %v2456 = vadd.f32 %v2320, %v2448
        %v2457 = vadd.f32 %v2359, %v2449
        %v2458 = vadd.f32 %v2361, %v2450
        %v2459 = vadd.f32 %v2400, %v2451
        %v2460 = vadd.f32 %v2402, %v2452
        %v2461 = vadd.f32 %v2441, %v2453
        %v2462 = vadd.f32 %v2443, %v2454
        %v2463 = vadd.f32 %v2455, %v1436
        %v2464 = vadd.f32 %v2456, %v1436
        %v2465 = vadd.f32 %v2457, %v1436
        %v2466 = vadd.f32 %v2458, %v1436
        %v2467 = vadd.f32 %v2459, %v1436
        %v2468 = vadd.f32 %v2460, %v1436
        %v2469 = vadd.f32 %v2461, %v1436
        %v2470 = vadd.f32 %v2462, %v1436
        %vm2471 = vcmp.gt.f32.partialorder %v2463, 0.0
        %vm2472 = vcmp.gt.f32.partialorder %v2464, 0.0
        %vm2473 = vcmp.gt.f32.partialorder %v2465, 0.0
        %vm2474 = vcmp.gt.f32.partialorder %v2466, 0.0
        %vm2475 = vcmp.gt.f32.partialorder %v2467, 0.0
        %vm2476 = vcmp.gt.f32.partialorder %v2468, 0.0
        %vm2477 = vcmp.gt.f32.partialorder %v2469, 0.0
        %vm2478 = vcmp.gt.f32.partialorder %v2470, 0.0
        %v2479 = vmul.f32 %v2463, 0.01
        %v2480 = vmul.f32 %v2464, 0.01
        %v2481 = vmul.f32 %v2465, 0.01
        %v2482 = vmul.f32 %v2466, 0.01
        %v2483 = vmul.f32 %v2467, 0.01
        %v2484 = vmul.f32 %v2468, 0.01
        %v2485 = vmul.f32 %v2469, 0.01
        %v2486 = vmul.f32 %v2470, 0.01
        %v2487 = vsel %vm2471, %v2463, %v2479
        %v2488 = vsel %vm2472, %v2464, %v2480
        %v2489 = vsel %vm2473, %v2465, %v2481
        %v2490 = vsel %vm2474, %v2466, %v2482
        %v2491 = vsel %vm2475, %v2467, %v2483
        %v2492 = vsel %vm2476, %v2468, %v2484
        %v2493 = vsel %vm2477, %v2469, %v2485
        %v2494 = vsel %vm2478, %v2470, %v2486
        %v2495 = vadd.f32 %v2487, %v1499
        %v2496 = vadd.f32 %v2488, %v1507
        %v2497 = vadd.f32 %v2489, %v1500
        %v2498 = vadd.f32 %v2490, %v1508
        %v2499 = vadd.f32 %v2491, %v1501
        %v2500 = vadd.f32 %v2492, %v1509
        %v2501 = vadd.f32 %v2493, %v1502
        %v2502 = vadd.f32 %v2494, %v1510
        %v2511 = vcombine.low %v2495, %v2496
        %v2512 = vcombine.low %v2497, %v2498
        %v2513 = vcombine.low %v2499, %v2500
        %v2514 = vcombine.low %v2501, %v2502
        %s2519 = scalar_lea.vmem %s241, 32 [#allocation8]
        %2520 = vst [vmem:[%s2519] sm:$0xff] %v2511
        %2521 = vst [vmem:[%s2519 + $0x8] sm:$0xff] %v2512
        %2522 = vst [vmem:[%s2519 + $0x10] sm:$0xff] %v2513
        %2523 = vst [vmem:[%s2519 + $0x18] sm:$0xff] %v2514
        %s2524 = sand.u32 %s117, 1
        %s2525 = scalar_lea.sflag [#allocation4], %s2524
        %s2526 = sand.u32 %s117, 1
        %s2527 = smul.addr %s2526, 64
        %s2528 = scalar_lea.vmem [#allocation8], %s2527
        // Predicated region
        $region49: #{tpu_custom_call.1} parent=35 // pred_check
          %p2529 = pneg %p127
        $region50: #{tpu_custom_call.1} parent=35 // pred_check_branch
          %2531 = sbr.rel (%p2529) target = $region52
        $region51: #{tpu_custom_call.1} parent=35 // pred_region
          %s2532 = smul.u32 2, %s20
          %s2534 = ssub.s32 1024, 1024
          %2535 = vsyncadd %s2525, %s2534
          %s2536 = smul.addr %s2532, 8
          %s2537 = smul.addr %s2536, 64
          %s2538 = scalar_lea.hbm %s4, %s2537
          %s2539 = sshll.u32 %s2528, 4
          %s2540 = int_to_ptr.vmem [resolvable:$true] %s2539
          %2545 = dma.vmem_to_hbm [thread:$0]  %s2540, 1024, %s2538, %s2525, 512, 512, 32
        $region52: #{tpu_custom_call.1} parent=35 // pred_fallthru
          _
      $region36: #{tpu_custom_call.1} parent=5 // pred_fallthru
        _
      %p2546 = scmp.le.s32.totalorder 2, %s15
      // Predicated region
      $region53: #{tpu_custom_call.1} parent=5 // pred_check
        %p2547 = pneg %p2546
      $region54: #{tpu_custom_call.1} parent=5 // pred_check_branch
        %2549 = sbr.rel (%p2547) target = $region56
      $region55: #{tpu_custom_call.1} parent=5 // pred_region
        %s2550 = ssub.s32 %s15, 2
        // Predicated region
        $region57: #{tpu_custom_call.1} parent=55 // pred_check
          %p2551 = pneg %p133
        $region58: #{tpu_custom_call.1} parent=55 // pred_check_branch
          %2553 = sbr.rel (%p2551) target = $region60
        $region59: #{tpu_custom_call.1} parent=55 // pred_region
          %s2554 = sand.u32 %s118, 1
          %s2555 = scalar_lea.sflag [#allocation4], %s2554
          %s2556 = sand.u32 %s118, 1
          %s2557 = smul.addr %s2556, 64
          %s2558 = scalar_lea.vmem [#allocation8], %s2557
          %2559 = dma.done %s2555, 1024
        $region60: #{tpu_custom_call.1} parent=55 // pred_fallthru
          _
      $region56: #{tpu_custom_call.1} parent=5 // pred_fallthru
        _
    $region6: #{tpu_custom_call.1} parent=1 // loop_footer
      %s19 = sadd.s32 1, %s15
    $region7: #{tpu_custom_call.1} parent=1 // loop_footer_branch
      %14 = sbr.rel target = $region3
    $region8: #{tpu_custom_call.1} parent=1 // loop_exit
      _
    %2560 = vsyncpa [#allocation3], 1
    %s2561 = scalar_lea.sflag [#allocation3], 1
    %2562 = vsyncpa %s2561, 1
    %2563 = vsyncpa [#allocation6], 1
    %2564 = vsyncpa [#allocation4], 1
    %s2565 = scalar_lea.sflag [#allocation4], 1
    %2566 = vsyncpa %s2565, 1

</llo_original>
